<compile_context>
chip_gen: v7x
topology: tpu7x:2x2x1
jax: 0.10.0
libtpu: 0.0.40
codegen_flags: <defaults>
</compile_context>

<pallas_src>
import functools

import jax
import jax.numpy as jnp
from jax import lax
from jax.experimental import pallas as pl
from jax.experimental.pallas import tpu as pltpu


def channel_attention_kernel(x_ref, wqkv_ref, wproj_ref, bproj_ref, tempc_ref,
                             bias_ref, o_ref, *, seq_len, block_b, batched):
    N = seq_len
    C = x_ref.shape[-1]
    rows = block_b * N

    # Hot matmul #1: QKV projection on the whole [BBLK*N, C] slab
    # (bf16 operands, f32 accumulation).
    qkv = jnp.dot(x_ref[...], wqkv_ref[...],
                  preferred_element_type=jnp.float32)        # [rows, 3C] f32

    temp_c = tempc_ref[...]          # [1, C]  per-channel temperature
    attn_bias = bias_ref[...]        # [C, C]  0 on head-diagonal blocks, -1e30 off
    eps2 = jnp.float32(1e-24)        # (1e-12)^2 : F.normalize clamp on squared norm

    if batched:
        # [rows, *] -> [block_b, N, *]: pure leading-dim split, layout preserving
        # because N % 8 == 0 (sublane tile).
        q = qkv[:, :C].reshape(block_b, N, C)
        k = qkv[:, C:2 * C].reshape(block_b, N, C)
        v = qkv[:, 2 * C:].reshape(block_b, N, C)

        # F.normalize over N (per channel column), all batches / heads at once.
        qn = q * lax.rsqrt(jnp.maximum(jnp.sum(q * q, axis=1, keepdims=True), eps2))
        kn = k * lax.rsqrt(jnp.maximum(jnp.sum(k * k, axis=1, keepdims=True), eps2))
        qn = qn * temp_c                     # fold per-head temperature (row scale)

        # attn[b, i, j] = sum_n qn[b, n, i] * kn[b, n, j]   (full channel Gram)
        attn = lax.dot_general(qn, kn, (((1,), (1,)), ((0,), (0,))),
                               preferred_element_type=jnp.float32)  # [block_b, C, C]
        attn = attn + attn_bias              # mask cross-head entries BEFORE softmax
        attn = attn - jnp.max(attn, axis=-1, keepdims=True)
        attn = jnp.exp(attn)
        attn = attn * pl.reciprocal(jnp.sum(attn, axis=-1, keepdims=True), approx=True)

        # y[b, n, i] = sum_j v[b, n, j] * attn[b, i, j]  (cross-head terms exactly 0)
        y = lax.dot_general(v.astype(jnp.bfloat16), attn.astype(jnp.bfloat16),
                            (((2,), (2,)), ((0,), (0,))),
                            preferred_element_type=jnp.float32)     # [block_b, N, C]
        y = y.reshape(rows, C)
    else:
        # Fallback (N not 8-aligned): static unroll over batch elements.
        q_all = qkv[:, :C]
        k_all = qkv[:, C:2 * C]
        v_all = qkv[:, 2 * C:]
        ys = []
        for b in range(block_b):
            q = q_all[b * N:(b + 1) * N, :]
            k = k_all[b * N:(b + 1) * N, :]
            v = v_all[b * N:(b + 1) * N, :]
            qn = q * lax.rsqrt(jnp.maximum(jnp.sum(q * q, axis=0, keepdims=True), eps2))
            kn = k * lax.rsqrt(jnp.maximum(jnp.sum(k * k, axis=0, keepdims=True), eps2))
            qn = qn * temp_c
            attn = lax.dot_general(qn, kn, (((0,), (0,)), ((), ())),
                                   preferred_element_type=jnp.float32)  # [C, C]
            attn = attn + attn_bias
            attn = attn - jnp.max(attn, axis=-1, keepdims=True)
            attn = jnp.exp(attn)
            attn = attn * pl.reciprocal(jnp.sum(attn, axis=-1, keepdims=True),
                                        approx=True)
            y_b = lax.dot_general(v.astype(jnp.bfloat16), attn.astype(jnp.bfloat16),
                                  (((1,), (1,)), ((), ())),
                                  preferred_element_type=jnp.float32)   # [N, C]
            ys.append(y_b)
        y = ys[0] if block_b == 1 else jnp.concatenate(ys, axis=0)

    # Hot matmul #2: output projection + bias (bf16 operands, f32 accumulation).
    out = jnp.dot(y.astype(jnp.bfloat16), wproj_ref[...],
                  preferred_element_type=jnp.float32)
    o_ref[...] = (out + bproj_ref[...]).astype(o_ref.dtype)


def _choose_block_b(B, N, C):
    """Pick how many batch elements to process per grid step.

    Targets: (a) BBLK*N >= 256 rows so the QKV/proj matmuls feed the MXU,
    (b) keep >= 2 grid steps when possible so both TensorCores on v7x get work
    under dimension_semantics=("parallel",), (c) stay well inside a conservative
    per-step VMEM budget (sized with v7x's 64 MiB VMEM in mind), and
    (d) keep the block's second-minor dim (BBLK*N) 8-aligned.
    """
    target_rows = 256
    budget_bytes = 8 * 1024 * 1024

    def step_bytes(d):
        rows = d * N
        io = 2 * (rows * C * 2 + rows * C * 4)                        # dbl-buffered in/out
        interm = rows * 3 * C * 4 + rows * C * 4 + 2 * d * C * C * 4  # qkv, y, attn temps
        return io + interm

    divisors = [d for d in range(1, B + 1) if B % d == 0]
    aligned = [d for d in divisors if (d * N) % 8 == 0 or d == B] or divisors
    feasible = [d for d in aligned if step_bytes(d) <= budget_bytes] or [min(aligned)]
    multi_step = [d for d in feasible if B // d >= 2] or feasible
    hit = [d for d in multi_step if d * N >= target_rows]
    return min(hit) if hit else max(multi_step)


def channel_attention(x, wqkv_t, wproj_t, bproj, temperature, *, num_heads,
                      block_b=None):
    """x: [B, N, C]; wqkv_t: [C, 3C]; wproj_t: [C, C]; bproj: [C]; temperature: [H]."""
    B, N, C = x.shape
    H = num_heads
    assert C % H == 0, "num_heads must divide C"
    d = C // H
    if block_b is None:
        block_b = _choose_block_b(B, N, C)
    assert B % block_b == 0, "block_b must divide B"
    grid_b = B // block_b
    rows = block_b * N
    batched = (N % 8 == 0)

    # Flatten (B, N) -> rows so the in-kernel matmuls see a tall M; cast MXU
    # operands to bf16 (accumulation stays f32 inside the kernel).
    x2 = x.reshape(B * N, C).astype(jnp.bfloat16)
    wqkv_bf = wqkv_t.astype(jnp.bfloat16)
    wproj_bf = wproj_t.astype(jnp.bfloat16)
    bproj2 = bproj.reshape(1, C).astype(jnp.float32)

    # Per-channel temperature (channel c belongs to head c // d).
    temp_c = jnp.repeat(temperature.astype(jnp.float32), d).reshape(1, C)
    # Additive block-diagonal head mask for the [C, C] channel-attention matrix.
    head_id = jnp.arange(C, dtype=jnp.int32) // d
    attn_bias = jnp.where(head_id[:, None] == head_id[None, :],
                          jnp.float32(0.0), jnp.float32(-1e30))

    out_dtype = x.dtype
    flops = 2 * B * N * C * (3 * C)          # qkv projection
    flops += 2 * B * N * C * C * 2           # gram + attn @ v
    flops += 2 * B * N * C * C               # output projection
    itemsize_out = jnp.dtype(out_dtype).itemsize
    bytes_accessed = (B * N * C) * (2 + itemsize_out)            # x (bf16) + out
    bytes_accessed += (C * 3 * C + C * C) * 2                    # weights (bf16)
    bytes_accessed += (2 * C + C * C) * 4                        # bias, temp, mask (f32)
    cost = pl.CostEstimate(flops=flops,
                           transcendentals=B * (C * C + 3 * C),
                           bytes_accessed=bytes_accessed)

    kernel = functools.partial(channel_attention_kernel, seq_len=N,
                               block_b=block_b, batched=batched)
    out2 = pl.pallas_call(
        kernel,
        out_shape=jax.ShapeDtypeStruct((B * N, C), out_dtype),
        grid_spec=pltpu.PrefetchScalarGridSpec(
            num_scalar_prefetch=0,
            grid=(grid_b,),
            in_specs=[
                pl.BlockSpec((rows, C), lambda b: (b, 0)),        # x slab (bf16)
                pl.BlockSpec((C, 3 * C), lambda b: (0, 0)),       # Wqkv^T (bf16, fetched once)
                pl.BlockSpec((C, C), lambda b: (0, 0)),           # Wproj^T (bf16, fetched once)
                pl.BlockSpec((1, C), lambda b: (0, 0)),           # b_proj (f32)
                pl.BlockSpec((1, C), lambda b: (0, 0)),           # per-channel temperature (f32)
                pl.BlockSpec((C, C), lambda b: (0, 0)),           # head-block mask bias (f32)
            ],
            out_specs=pl.BlockSpec((rows, C), lambda b: (b, 0)),
        ),
        compiler_params=pltpu.CompilerParams(
            dimension_semantics=("parallel",)),
        cost_estimate=cost,
    )(x2, wqkv_bf, wproj_bf, bproj2, temp_c, attn_bias)
    return out2.reshape(B, N, C)


def channel_attention_ref(x, wqkv_t, wproj_t, bproj, temperature, *, num_heads):
    """Pure-JAX f32 reference mirroring the PyTorch forward exactly."""
    B, N, C = x.shape
    H = num_heads
    d = C // H
    qkv = x @ wqkv_t                                             # [B, N, 3C]
    qkv = qkv.reshape(B, N, 3, H, d).transpose(2, 0, 3, 1, 4)    # [3, B, H, N, d]
    q, k, v = qkv[0], qkv[1], qkv[2]
    q = jnp.swapaxes(q, -2, -1)                                  # [B, H, d, N]
    k = jnp.swapaxes(k, -2, -1)
    v = jnp.swapaxes(v, -2, -1)
    qn = q / jnp.maximum(jnp.linalg.norm(q, axis=-1, keepdims=True), 1e-12)
    kn = k / jnp.maximum(jnp.linalg.norm(k, axis=-1, keepdims=True), 1e-12)
    attn = (qn @ jnp.swapaxes(kn, -2, -1)) * temperature.reshape(1, H, 1, 1)
    attn = jax.nn.softmax(attn, axis=-1)
    y = (attn @ v).transpose(0, 3, 1, 2).reshape(B, N, C)
    return y @ wproj_t + bproj


if __name__ == "__main__":
    B, N, C, H = 8, 16, 32, 8   # dim=32, num_heads=8 -> head_dim=4

    key = jax.random.PRNGKey(0)
    kx, kqkv, kproj, kbias = jax.random.split(key, 4)

    x = jax.random.normal(kx, (B, N, C), dtype=jnp.float32)
    # nn.Linear(dim, 3*dim, bias=False): weight [3C, C]; we pass its transpose.
    wqkv_t = jax.random.normal(kqkv, (C, 3 * C), dtype=jnp.float32) * 0.05
    # nn.Linear(dim, dim): weight [C, C] (+ bias); pass transpose.
    wproj_t = jax.random.normal(kproj, (C, C), dtype=jnp.float32) * 0.05
    bproj = jax.random.normal(kbias, (C,), dtype=jnp.float32) * 0.05
    # nn.Parameter(torch.ones(num_heads, 1, 1)); use non-trivial values so the
    # per-head temperature folding is actually exercised.
    temperature = jnp.float32(1.0) + 0.25 * jnp.arange(H, dtype=jnp.float32)

    out = channel_attention(x, wqkv_t, wproj_t, bproj, temperature, num_heads=H)
    out = jax.block_until_ready(out)

    ref = channel_attention_ref(x, wqkv_t, wproj_t, bproj, temperature, num_heads=H)
    assert out.shape == (B, N, C)
    max_err = jnp.max(jnp.abs(out - ref))
    # bf16 MXU operands (f32 accumulation) => compare against the f32 reference
    # with a bf16-appropriate tolerance.
    assert jnp.allclose(out, ref, atol=1e-2, rtol=1e-2), f"max abs err {max_err}"

    # TODO(synk): attn_drop / proj_drop are 0 in the reference config, so dropout
    # is identity and intentionally not implemented in-kernel.
    print("KERNEL_OK")
</pallas_src>

<mosaic_0001>
module attributes {stable_mosaic.version = 11 : i64} {
  func.func @channel_attention_kernel(%arg0: i32, %arg1: memref<64x32xbf16, #tpu.memory_space<vmem>>, %arg2: memref<32x96xbf16, #tpu.memory_space<vmem>>, %arg3: memref<32x32xbf16, #tpu.memory_space<vmem>>, %arg4: memref<1x32xf32, #tpu.memory_space<vmem>>, %arg5: memref<1x32xf32, #tpu.memory_space<vmem>>, %arg6: memref<32x32xf32, #tpu.memory_space<vmem>>, %arg7: memref<64x32xf32, #tpu.memory_space<vmem>>) attributes {dimension_semantics = [#tpu.dimension_semantics<parallel>], iteration_bounds = array<i64: 2>, scalar_prefetch = 0 : i64, scratch_operands = 0 : i64, tpu.core_type = #tpu.core_type<tc>, window_params = [{transform_indices = @transform_0, window_bounds = array<i64: 64, 32>}, {pipeline_mode = #tpu.pipeline_mode<synchronous>, transform_indices = @transform_1, window_bounds = array<i64: 32, 96>}, {pipeline_mode = #tpu.pipeline_mode<synchronous>, transform_indices = @transform_2, window_bounds = array<i64: 32, 32>}, {pipeline_mode = #tpu.pipeline_mode<synchronous>, transform_indices = @transform_3, window_bounds = array<i64: 1, 32>}, {pipeline_mode = #tpu.pipeline_mode<synchronous>, transform_indices = @transform_4, window_bounds = array<i64: 1, 32>}, {pipeline_mode = #tpu.pipeline_mode<synchronous>, transform_indices = @transform_5, window_bounds = array<i64: 32, 32>}, {transform_indices = @transform_6, window_bounds = array<i64: 64, 32>}]} {
    %c0 = arith.constant 0 : index
    %c0_0 = arith.constant 0 : index
    %0 = vector.load %arg1[%c0, %c0_0] : memref<64x32xbf16, #tpu.memory_space<vmem>>, vector<64x32xbf16>
    %c0_1 = arith.constant 0 : index
    %c0_2 = arith.constant 0 : index
    %1 = vector.load %arg2[%c0_1, %c0_2] : memref<32x96xbf16, #tpu.memory_space<vmem>>, vector<32x96xbf16>
    %cst = arith.constant dense<0.000000e+00> : vector<64x96xf32>
    %2 = tpu.matmul %0, %1, %cst {dimension_numbers = #tpu.dot_dimension_numbers<[1], [0], [0], [1], [0, 0, 1, 1], [], []>} : vector<64x32xbf16>, vector<32x96xbf16>, vector<64x96xf32> -> vector<64x96xf32>
    %c0_3 = arith.constant 0 : index
    %c0_4 = arith.constant 0 : index
    %3 = vector.load %arg5[%c0_3, %c0_4] : memref<1x32xf32, #tpu.memory_space<vmem>>, vector<1x32xf32>
    %c0_5 = arith.constant 0 : index
    %c0_6 = arith.constant 0 : index
    %4 = vector.load %arg6[%c0_5, %c0_6] : memref<32x32xf32, #tpu.memory_space<vmem>>, vector<32x32xf32>
    %5 = vector.extract_strided_slice %2 {offsets = [0, 0], sizes = [64, 32], strides = [1, 1]} : vector<64x96xf32> to vector<64x32xf32>
    %6 = vector.shape_cast %5 : vector<64x32xf32> to vector<4x16x32xf32>
    %7 = vector.extract_strided_slice %2 {offsets = [0, 32], sizes = [64, 32], strides = [1, 1]} : vector<64x96xf32> to vector<64x32xf32>
    %8 = vector.shape_cast %7 : vector<64x32xf32> to vector<4x16x32xf32>
    %9 = vector.extract_strided_slice %2 {offsets = [0, 64], sizes = [64, 32], strides = [1, 1]} : vector<64x96xf32> to vector<64x32xf32>
    %10 = vector.shape_cast %9 : vector<64x32xf32> to vector<4x16x32xf32>
    %11 = arith.mulf %6, %6 : vector<4x16x32xf32>
    %cst_7 = arith.constant dense<0.000000e+00> : vector<4x32xf32>
    %12 = vector.multi_reduction <add>, %11, %cst_7 [1] : vector<4x16x32xf32> to vector<4x32xf32>
    %13 = vector.shape_cast %12 : vector<4x32xf32> to vector<4x1x32xf32>
    %cst_8 = arith.constant 1.000000e-24 : f32
    %14 = vector.broadcast %cst_8 : f32 to vector<4x1x32xf32>
    %15 = arith.maximumf %13, %14 : vector<4x1x32xf32>
    %16 = math.rsqrt %15 : vector<4x1x32xf32>
    %17 = vector.broadcast %16 : vector<4x1x32xf32> to vector<4x16x32xf32>
    %18 = arith.mulf %6, %17 : vector<4x16x32xf32>
    %19 = arith.mulf %8, %8 : vector<4x16x32xf32>
    %cst_9 = arith.constant dense<0.000000e+00> : vector<4x32xf32>
    %20 = vector.multi_reduction <add>, %19, %cst_9 [1] : vector<4x16x32xf32> to vector<4x32xf32>
    %21 = vector.shape_cast %20 : vector<4x32xf32> to vector<4x1x32xf32>
    %cst_10 = arith.constant 1.000000e-24 : f32
    %22 = vector.broadcast %cst_10 : f32 to vector<4x1x32xf32>
    %23 = arith.maximumf %21, %22 : vector<4x1x32xf32>
    %24 = math.rsqrt %23 : vector<4x1x32xf32>
    %25 = vector.broadcast %24 : vector<4x1x32xf32> to vector<4x16x32xf32>
    %26 = arith.mulf %8, %25 : vector<4x16x32xf32>
    %27 = vector.shape_cast %3 : vector<1x32xf32> to vector<1x1x32xf32>
    %28 = vector.broadcast %27 : vector<1x1x32xf32> to vector<4x16x32xf32>
    %29 = arith.mulf %18, %28 : vector<4x16x32xf32>
    %cst_11 = arith.constant dense<0.000000e+00> : vector<4x32x32xf32>
    %30 = tpu.matmul %29, %26, %cst_11 {dimension_numbers = #tpu.dot_dimension_numbers<[1], [1], [2], [2], [0, 0, 0, 2, 1, 2], [0], [0]>} : vector<4x16x32xf32>, vector<4x16x32xf32>, vector<4x32x32xf32> -> vector<4x32x32xf32>
    %31 = vector.shape_cast %4 : vector<32x32xf32> to vector<1x32x32xf32>
    %32 = vector.broadcast %31 : vector<1x32x32xf32> to vector<4x32x32xf32>
    %33 = arith.addf %30, %32 : vector<4x32x32xf32>
    %cst_12 = arith.constant dense<0xFF800000> : vector<4x32xf32>
    %34 = vector.multi_reduction <maximumf>, %33, %cst_12 [2] : vector<4x32x32xf32> to vector<4x32xf32>
    %35 = vector.shape_cast %34 : vector<4x32xf32> to vector<4x32x1xf32>
    %36 = vector.broadcast %35 : vector<4x32x1xf32> to vector<4x32x32xf32>
    %37 = arith.subf %33, %36 : vector<4x32x32xf32>
    %38 = math.exp %37 : vector<4x32x32xf32>
    %cst_13 = arith.constant dense<0.000000e+00> : vector<4x32xf32>
    %39 = vector.multi_reduction <add>, %38, %cst_13 [2] : vector<4x32x32xf32> to vector<4x32xf32>
    %40 = vector.shape_cast %39 : vector<4x32xf32> to vector<4x32x1xf32>
    %41 = tpu.reciprocal %40 {approx = true} : vector<4x32x1xf32> -> vector<4x32x1xf32>
    %42 = vector.broadcast %41 : vector<4x32x1xf32> to vector<4x32x32xf32>
    %43 = arith.mulf %38, %42 : vector<4x32x32xf32>
    %44 = arith.truncf %10 : vector<4x16x32xf32> to vector<4x16x32xbf16>
    %45 = arith.truncf %43 : vector<4x32x32xf32> to vector<4x32x32xbf16>
    %cst_14 = arith.constant dense<0.000000e+00> : vector<4x16x32xf32>
    %46 = tpu.matmul %44, %45, %cst_14 {dimension_numbers = #tpu.dot_dimension_numbers<[2], [2], [1], [1], [0, 0, 0, 1, 1, 1], [0], [0]>} : vector<4x16x32xbf16>, vector<4x32x32xbf16>, vector<4x16x32xf32> -> vector<4x16x32xf32>
    %47 = vector.shape_cast %46 : vector<4x16x32xf32> to vector<64x32xf32>
    %48 = arith.truncf %47 : vector<64x32xf32> to vector<64x32xbf16>
    %c0_15 = arith.constant 0 : index
    %c0_16 = arith.constant 0 : index
    %49 = vector.load %arg3[%c0_15, %c0_16] : memref<32x32xbf16, #tpu.memory_space<vmem>>, vector<32x32xbf16>
    %cst_17 = arith.constant dense<0.000000e+00> : vector<64x32xf32>
    %50 = tpu.matmul %48, %49, %cst_17 {dimension_numbers = #tpu.dot_dimension_numbers<[1], [0], [0], [1], [0, 0, 1, 1], [], []>} : vector<64x32xbf16>, vector<32x32xbf16>, vector<64x32xf32> -> vector<64x32xf32>
    %c0_18 = arith.constant 0 : index
    %c0_19 = arith.constant 0 : index
    %51 = vector.load %arg4[%c0_18, %c0_19] : memref<1x32xf32, #tpu.memory_space<vmem>>, vector<1x32xf32>
    %52 = vector.broadcast %51 : vector<1x32xf32> to vector<64x32xf32>
    %53 = arith.addf %50, %52 : vector<64x32xf32>
    %c0_20 = arith.constant 0 : index
    %c0_21 = arith.constant 0 : index
    %54 = vector.load %arg7[%c0_20, %c0_21] : memref<64x32xf32, #tpu.memory_space<vmem>>, vector<64x32xf32>
    tpu.vector_store %arg7[%c0_20, %c0_21], %53 {strides = array<i32>} : memref<64x32xf32, #tpu.memory_space<vmem>>, vector<64x32xf32>,
    return
  }
  func.func @transform_0(%arg0: i32) -> (i32, i32) {
    %c0_i32 = arith.constant 0 : i32
    %c0_i32_0 = arith.constant 0 : i32
    return %arg0, %c0_i32 : i32, i32
  }
  func.func @transform_1(%arg0: i32) -> (i32, i32) {
    %c0_i32 = arith.constant 0 : i32
    %c0_i32_0 = arith.constant 0 : i32
    %c0_i32_1 = arith.constant 0 : i32
    return %c0_i32, %c0_i32_0 : i32, i32
  }
  func.func @transform_2(%arg0: i32) -> (i32, i32) {
    %c0_i32 = arith.constant 0 : i32
    %c0_i32_0 = arith.constant 0 : i32
    %c0_i32_1 = arith.constant 0 : i32
    return %c0_i32, %c0_i32_0 : i32, i32
  }
  func.func @transform_3(%arg0: i32) -> (i32, i32) {
    %c0_i32 = arith.constant 0 : i32
    %c0_i32_0 = arith.constant 0 : i32
    %c0_i32_1 = arith.constant 0 : i32
    return %c0_i32, %c0_i32_0 : i32, i32
  }
  func.func @transform_4(%arg0: i32) -> (i32, i32) {
    %c0_i32 = arith.constant 0 : i32
    %c0_i32_0 = arith.constant 0 : i32
    %c0_i32_1 = arith.constant 0 : i32
    return %c0_i32, %c0_i32_0 : i32, i32
  }
  func.func @transform_5(%arg0: i32) -> (i32, i32) {
    %c0_i32 = arith.constant 0 : i32
    %c0_i32_0 = arith.constant 0 : i32
    %c0_i32_1 = arith.constant 0 : i32
    return %c0_i32, %c0_i32_0 : i32, i32
  }
  func.func @transform_6(%arg0: i32) -> (i32, i32) {
    %c0_i32 = arith.constant 0 : i32
    %c0_i32_0 = arith.constant 0 : i32
    return %arg0, %c0_i32 : i32, i32
  }
}

</mosaic_0001>

<llo_original>
// kernel: tpu_custom_call.1
$region0: #{tpu_custom_call.1}
  #allocation0 [shape = 'u32[]', space=smem, size = 0x4, offset = 0x4, fixed_abs, tag = 'smem constant byte address 0x4 - core index']
  #allocation1 [shape = 'u32[144,128]{1,0:T(1,128)}', space=vmem, size = 0x12000, scoped, tag = 'internal scratch']
  %s0 = inlined_call_operand.vmem [shape: bf16[128,32], index: 0, kind: input, shape index: {}]
  %s1 = inlined_call_operand.vmem [shape: bf16[32,96], index: 1, kind: input, shape index: {}]
  %s2 = inlined_call_operand.vmem [shape: bf16[32,32], index: 2, kind: input, shape index: {}]
  %s3 = inlined_call_operand.vmem [shape: f32[1,32], index: 3, kind: input, shape index: {}]
  %s4 = inlined_call_operand.vmem [shape: f32[1,32], index: 4, kind: input, shape index: {}]
  %s5 = inlined_call_operand.vmem [shape: f32[32,32], index: 5, kind: input, shape index: {}]
  %s6 = inlined_call_operand.vmem [shape: f32[128,32], index: 6, kind: output, shape index: {}]
  %s7 = sld [smem:[#allocation0]]
  $region57: #{tpu_custom_call.1} parent=0
    _
  %s9 = ssub.s32 1, %s7
  %s10 = scalar_select 0, %s9, %s7
  loop: start=0, step=1, limit=4
  $region2: #{tpu_custom_call.1} parent=0 // loop_pre_header
    _
  $region3: #{tpu_custom_call.1} parent=0 // loop_header
    %s12 = sphi 0, %s16
    %p13 = scmp.ge.s32.totalorder %s12, 4
    %s22 = sphi 0, %s24
    %s25 = sphi 0, %s22
    %s26 = sphi 0, %s25
    %s42 = sphi 0, %s26
    %s46 = sphi 0, %s46
    %s48 = sphi 0, %s46
    %s49 = sphi 0, %s48
    %s63 = sphi 0, %s49
    %s67 = sphi 0, %s67
    %s69 = sphi 0, %s67
    %s70 = sphi 0, %s69
    %s84 = sphi 0, %s70
    %s88 = sphi 0, %s88
    %s90 = sphi 0, %s88
    %s91 = sphi 0, %s90
    %s105 = sphi 0, %s91
    %s109 = sphi 0, %s109
    %s111 = sphi 0, %s109
    %s112 = sphi 0, %s111
    %s126 = sphi 0, %s112
    %s130 = sphi 0, %s130
    %s132 = sphi 0, %s130
    %s133 = sphi 0, %s132
    %s147 = sphi 0, %s133
    %s153 = sphi 0, %s155
    %s156 = sphi 0, %s153
    %s157 = sphi 0, %s156
    %s173 = sphi 0, %s157
  $region4: #{tpu_custom_call.1} parent=0 // loop_header_branch
    %15 = sbr.rel (%p13) target = $region8
  $region5: #{tpu_custom_call.1} parent=0 // loop_body
    %s17 = ssub.s32 %s12, 1
    %s18 = ssub.s32 %s12, 2
    %s19 = sadd.s32 %s12, 1
    %s20 = ssub.s32 %s12, %s19
    %p21 = scmp.eq.s32.totalorder %s20, 0
    %s23 = sadd.s32 %s22, 1
    %s24 = scalar_select %p21, %s22, %s23
    %p27 = pneg %p21
    %p28 = scmp.eq.s32.totalorder %s12, 1
    %p29 = por %p27, %p28
    %p30 = scmp.ne.s32.totalorder %s22, %s25
    %p31 = scmp.eq.s32.totalorder %s12, 0
    %p32 = por %p30, %p31
    %p33 = scmp.ne.s32.totalorder %s22, %s25
    %p34 = scmp.eq.s32.totalorder %s17, 1
    %p35 = por %p33, %p34
    %p36 = scmp.ne.s32.totalorder %s25, %s26
    %p37 = scmp.eq.s32.totalorder %s17, 0
    %p38 = por %p36, %p37
    %p39 = scmp.ne.s32.totalorder %s25, %s26
    %p40 = scmp.eq.s32.totalorder %s18, 1
    %p41 = por %p39, %p40
    %p43 = scmp.ne.s32.totalorder %s26, %s42
    %p44 = scmp.eq.s32.totalorder %s18, 0
    %p45 = por %p43, %p44
    %s47 = sadd.s32 %s46, 1
    %p50 = scmp.eq.s32.totalorder %s12, 1
    %p51 = scmp.ne.s32.totalorder %s46, %s48
    %p52 = scmp.eq.s32.totalorder %s12, 0
    %p53 = por %p51, %p52
    %p54 = scmp.ne.s32.totalorder %s46, %s48
    %p55 = scmp.eq.s32.totalorder %s17, 1
    %p56 = por %p54, %p55
    %p57 = scmp.ne.s32.totalorder %s48, %s49
    %p58 = scmp.eq.s32.totalorder %s17, 0
    %p59 = por %p57, %p58
    %p60 = scmp.ne.s32.totalorder %s48, %s49
    %p61 = scmp.eq.s32.totalorder %s18, 1
    %p62 = por %p60, %p61
    %p64 = scmp.ne.s32.totalorder %s49, %s63
    %p65 = scmp.eq.s32.totalorder %s18, 0
    %p66 = por %p64, %p65
    %s68 = sadd.s32 %s67, 1
    %p71 = scmp.eq.s32.totalorder %s12, 1
    %p72 = scmp.ne.s32.totalorder %s67, %s69
    %p73 = scmp.eq.s32.totalorder %s12, 0
    %p74 = por %p72, %p73
    %p75 = scmp.ne.s32.totalorder %s67, %s69
    %p76 = scmp.eq.s32.totalorder %s17, 1
    %p77 = por %p75, %p76
    %p78 = scmp.ne.s32.totalorder %s69, %s70
    %p79 = scmp.eq.s32.totalorder %s17, 0
    %p80 = por %p78, %p79
    %p81 = scmp.ne.s32.totalorder %s69, %s70
    %p82 = scmp.eq.s32.totalorder %s18, 1
    %p83 = por %p81, %p82
    %p85 = scmp.ne.s32.totalorder %s70, %s84
    %p86 = scmp.eq.s32.totalorder %s18, 0
    %p87 = por %p85, %p86
    %s89 = sadd.s32 %s88, 1
    %p92 = scmp.eq.s32.totalorder %s12, 1
    %p93 = scmp.ne.s32.totalorder %s88, %s90
    %p94 = scmp.eq.s32.totalorder %s12, 0
    %p95 = por %p93, %p94
    %p96 = scmp.ne.s32.totalorder %s88, %s90
    %p97 = scmp.eq.s32.totalorder %s17, 1
    %p98 = por %p96, %p97
    %p99 = scmp.ne.s32.totalorder %s90, %s91
    %p100 = scmp.eq.s32.totalorder %s17, 0
    %p101 = por %p99, %p100
    %p102 = scmp.ne.s32.totalorder %s90, %s91
    %p103 = scmp.eq.s32.totalorder %s18, 1
    %p104 = por %p102, %p103
    %p106 = scmp.ne.s32.totalorder %s91, %s105
    %p107 = scmp.eq.s32.totalorder %s18, 0
    %p108 = por %p106, %p107
    %s110 = sadd.s32 %s109, 1
    %p113 = scmp.eq.s32.totalorder %s12, 1
    %p114 = scmp.ne.s32.totalorder %s109, %s111
    %p115 = scmp.eq.s32.totalorder %s12, 0
    %p116 = por %p114, %p115
    %p117 = scmp.ne.s32.totalorder %s109, %s111
    %p118 = scmp.eq.s32.totalorder %s17, 1
    %p119 = por %p117, %p118
    %p120 = scmp.ne.s32.totalorder %s111, %s112
    %p121 = scmp.eq.s32.totalorder %s17, 0
    %p122 = por %p120, %p121
    %p123 = scmp.ne.s32.totalorder %s111, %s112
    %p124 = scmp.eq.s32.totalorder %s18, 1
    %p125 = por %p123, %p124
    %p127 = scmp.ne.s32.totalorder %s112, %s126
    %p128 = scmp.eq.s32.totalorder %s18, 0
    %p129 = por %p127, %p128
    %s131 = sadd.s32 %s130, 1
    %p134 = scmp.eq.s32.totalorder %s12, 1
    %p135 = scmp.ne.s32.totalorder %s130, %s132
    %p136 = scmp.eq.s32.totalorder %s12, 0
    %p137 = por %p135, %p136
    %p138 = scmp.ne.s32.totalorder %s130, %s132
    %p139 = scmp.eq.s32.totalorder %s17, 1
    %p140 = por %p138, %p139
    %p141 = scmp.ne.s32.totalorder %s132, %s133
    %p142 = scmp.eq.s32.totalorder %s17, 0
    %p143 = por %p141, %p142
    %p144 = scmp.ne.s32.totalorder %s132, %s133
    %p145 = scmp.eq.s32.totalorder %s18, 1
    %p146 = por %p144, %p145
    %p148 = scmp.ne.s32.totalorder %s133, %s147
    %p149 = scmp.eq.s32.totalorder %s18, 0
    %p150 = por %p148, %p149
    %s151 = ssub.s32 %s12, %s19
    %p152 = scmp.eq.s32.totalorder %s151, 0
    %s154 = sadd.s32 %s153, 1
    %s155 = scalar_select %p152, %s153, %s154
    %p158 = pneg %p152
    %p159 = scmp.eq.s32.totalorder %s12, 1
    %p160 = por %p158, %p159
    %p161 = scmp.ne.s32.totalorder %s153, %s156
    %p162 = scmp.eq.s32.totalorder %s12, 0
    %p163 = por %p161, %p162
    %p164 = scmp.ne.s32.totalorder %s153, %s156
    %p165 = scmp.eq.s32.totalorder %s17, 1
    %p166 = por %p164, %p165
    %p167 = scmp.ne.s32.totalorder %s156, %s157
    %p168 = scmp.eq.s32.totalorder %s17, 0
    %p169 = por %p167, %p168
    %p170 = scmp.ne.s32.totalorder %s156, %s157
    %p171 = scmp.eq.s32.totalorder %s18, 1
    %p172 = por %p170, %p171
    %p174 = scmp.ne.s32.totalorder %s157, %s173
    %p175 = scmp.eq.s32.totalorder %s18, 0
    %p176 = por %p174, %p175
    %p177 = scmp.le.s32.totalorder 1, %s12
    %p178 = scmp.lt.s32.totalorder %s12, 3
    %p179 = pnand %p177, %p178
    %p180 = pneg %p179
    // Predicated region
    $region9: #{tpu_custom_call.1} parent=5 // pred_check
      _
    $region10: #{tpu_custom_call.1} parent=5 // pred_check_branch
      %182 = sbr.rel (%p179) target = $region12
    $region11: #{tpu_custom_call.1} parent=5 // pred_region
      %s183 = ssub.s32 %s12, 1
      // Predicated region
      $region13: #{tpu_custom_call.1} parent=11 // pred_check
        %p184 = pneg %p59
      $region14: #{tpu_custom_call.1} parent=11 // pred_check_branch
        %186 = sbr.rel (%p184) target = $region16
      $region15: #{tpu_custom_call.1} parent=11 // pred_region
        _
      $region16: #{tpu_custom_call.1} parent=11 // pred_fallthru
        _
      // Predicated region
      $region17: #{tpu_custom_call.1} parent=11 // pred_check
        %p187 = pneg %p80
      $region18: #{tpu_custom_call.1} parent=11 // pred_check_branch
        %189 = sbr.rel (%p187) target = $region20
      $region19: #{tpu_custom_call.1} parent=11 // pred_region
        _
      $region20: #{tpu_custom_call.1} parent=11 // pred_fallthru
        _
      // Predicated region
      $region21: #{tpu_custom_call.1} parent=11 // pred_check
        %p190 = pneg %p101
      $region22: #{tpu_custom_call.1} parent=11 // pred_check_branch
        %192 = sbr.rel (%p190) target = $region24
      $region23: #{tpu_custom_call.1} parent=11 // pred_region
        _
      $region24: #{tpu_custom_call.1} parent=11 // pred_fallthru
        _
      // Predicated region
      $region25: #{tpu_custom_call.1} parent=11 // pred_check
        %p193 = pneg %p122
      $region26: #{tpu_custom_call.1} parent=11 // pred_check_branch
        %195 = sbr.rel (%p193) target = $region28
      $region27: #{tpu_custom_call.1} parent=11 // pred_region
        _
      $region28: #{tpu_custom_call.1} parent=11 // pred_fallthru
        _
      // Predicated region
      $region29: #{tpu_custom_call.1} parent=11 // pred_check
        %p196 = pneg %p143
      $region30: #{tpu_custom_call.1} parent=11 // pred_check_branch
        %198 = sbr.rel (%p196) target = $region32
      $region31: #{tpu_custom_call.1} parent=11 // pred_region
        _
      $region32: #{tpu_custom_call.1} parent=11 // pred_fallthru
        _
    $region12: #{tpu_custom_call.1} parent=5 // pred_fallthru
      _
    %p199 = scmp.lt.s32.totalorder %s12, 2
    // Predicated region
    $region33: #{tpu_custom_call.1} parent=5 // pred_check
      %p200 = pneg %p199
    $region34: #{tpu_custom_call.1} parent=5 // pred_check_branch
      %202 = sbr.rel (%p200) target = $region36
    $region35: #{tpu_custom_call.1} parent=5 // pred_region
      // Predicated region
      $region37: #{tpu_custom_call.1} parent=35 // pred_check
        %p203 = pneg %p32
      $region38: #{tpu_custom_call.1} parent=35 // pred_check_branch
        %205 = sbr.rel (%p203) target = $region40
      $region39: #{tpu_custom_call.1} parent=35 // pred_region
        %s206 = smul.u32 8, %s12
        %p207 = scmp.lt.s32.totalorder %s206, 15
        %s208 = scalar_select %p207, %s206, 15
        %s209 = smul.addr %s208, 4
        %s210 = scalar_lea.vmem %s0, %s209
        %s211 = smul.u32 8, %s12
      $region40: #{tpu_custom_call.1} parent=35 // pred_fallthru
        _
    $region36: #{tpu_custom_call.1} parent=5 // pred_fallthru
      _
    %p212 = scmp.le.s32.totalorder 1, %s12
    %p213 = scmp.lt.s32.totalorder %s12, 3
    %p214 = pnand %p212, %p213
    %p215 = pneg %p214
    // Predicated region
    $region41: #{tpu_custom_call.1} parent=5 // pred_check
      _
    $region42: #{tpu_custom_call.1} parent=5 // pred_check_branch
      %217 = sbr.rel (%p214) target = $region44
    $region43: #{tpu_custom_call.1} parent=5 // pred_region
      %s218 = ssub.s32 %s12, 1
      %s219 = smul.u32 8, %s17
      %p220 = scmp.lt.s32.totalorder %s219, 15
      %s221 = scalar_select %p220, %s219, 15
      %s222 = smul.addr %s221, 4
      %s223 = scalar_lea.vmem %s0, %s222
      %p224 = pneg %p38
      %p225 = pneg %p35
      %p226 = pneg %p59
      %p227 = pneg %p56
      %p228 = pneg %p80
      %p229 = pneg %p77
      %p230 = pneg %p101
      %p231 = pneg %p98
      %p232 = pneg %p122
      %p233 = pneg %p119
      %p234 = pneg %p143
      %p235 = pneg %p140
      %p236 = pneg %p169
      %p237 = pneg %p166
      %s238 = smul.u32 8, %s17
      %p239 = scmp.lt.s32.totalorder %s238, 15
      %s240 = scalar_select %p239, %s238, 15
      %s241 = smul.addr %s240, 8
      %s242 = scalar_lea.vmem %s6, %s241
      %s243 = smul.u32 8, %s17
      %p244 = scmp.lt.s32.totalorder %s243, 15
      %s245 = scalar_select %p244, %s243, 15
      %s246 = smul.addr %s245, 4
      %s247 = scalar_lea.vmem %s0, %s246
      %s248 = smul.u32 8, %s17
      %s249 = smul.u32 8, %s17
      %p250 = scmp.lt.s32.totalorder %s249, 15
      %s251 = scalar_select %p250, %s249, 15
      %s252 = smul.addr %s251, 8
      %s253 = scalar_lea.vmem %s6, %s252
      %s254 = smul.u32 8, %s17
      %v256 = vld [vmem:[%s247] sm:$0xf]
      %v257 = vld [vmem:[%s247 + $0x4] sm:$0xf]
      %v258 = vld [vmem:[%s247 + $0x8] sm:$0xf]
      %v259 = vld [vmem:[%s247 + $0xc] sm:$0xf]
      %v260 = vld [vmem:[%s247 + $0x10] sm:$0xf]
      %v261 = vld [vmem:[%s247 + $0x14] sm:$0xf]
      %v262 = vld [vmem:[%s247 + $0x18] sm:$0xf]
      %v263 = vld [vmem:[%s247 + $0x1c] sm:$0xf]
      %v264 = vld [vmem:[%s1] sm:$0xf]
      %v265 = vld [vmem:[%s1 + $0x4] sm:$0xf]
      %v266 = vld [vmem:[%s1 + $0x8] sm:$0xf]
      %v267 = vld [vmem:[%s1 + $0xc] sm:$0xf]
      %v276 = vunpack.c.l.b16 %v256
      %v277 = vunpack.c.l.b16 %v257
      %v278 = vunpack.c.l.b16 %v258
      %v279 = vunpack.c.l.b16 %v259
      %v280 = vunpack.c.l.b16 %v260
      %v281 = vunpack.c.l.b16 %v261
      %v282 = vunpack.c.l.b16 %v262
      %v283 = vunpack.c.l.b16 %v263
      %v284 = vpack.c.b16 %v277, %v276
      %v285 = vpack.c.b16 %v279, %v278
      %v286 = vpack.c.b16 %v281, %v280
      %v287 = vpack.c.b16 %v283, %v282
      %v292 = vunpack.c.l.b16 %v264
      %v293 = vunpack.c.l.b16 %v265
      %v294 = vunpack.c.l.b16 %v266
      %v295 = vunpack.c.l.b16 %v267
      %v296 = vpack.c.b16 %v293, %v292
      %v297 = vpack.c.b16 %v295, %v294
      %vm300 = vcmask 261120
      %v302 = vsel %vm300, %v284, 0
      %v305 = vsel %vm300, %v285, 0
      %v308 = vsel %vm300, %v286, 0
      %v311 = vsel %vm300, %v287, 0
      %313 = vmatprep.subr.bf16.mxu0 0
      %314 = vmatpush1.bf16.msra.mxu0 %v296
      %315 = vmatprep.subr.bf16.mxu0 0
      %316 = vmatpush1.bf16.msra.mxu0 %v297
      %317 = vmatprep.subr.bf16.mxu0 0
      %318 = vmatpush1.bf16.msra.mxu0 0
      %319 = vmatprep.subr.bf16.mxu0 0
      %320 = vmatpush1.bf16.msra.mxu0 0
      %321 = vmatprep.subr.bf16.mxu0 0
      %322 = vmatpush1.bf16.msra.mxu0 0
      %323 = vmatprep.subr.bf16.mxu0 0
      %324 = vmatpush1.bf16.msra.mxu0 0
      %325 = vmatprep.subr.bf16.mxu0 0
      %326 = vmatpush1.bf16.msra.mxu0 0
      %327 = vmatprep.subr.bf16.mxu0 0
      %328 = vmatpush1.bf16.msra.mxu0 0
      %329 = vmatprep.subr.bf16.mxu0 0
      %330 = vmatpush1.bf16.msra.mxu0 0
      %331 = vmatprep.subr.bf16.mxu0 0
      %332 = vmatpush1.bf16.msra.mxu0 0
      %333 = vmatprep.subr.bf16.mxu0 0
      %334 = vmatpush1.bf16.msra.mxu0 0
      %335 = vmatprep.subr.bf16.mxu0 0
      %336 = vmatpush1.bf16.msra.mxu0 0
      %337 = vmatprep.subr.bf16.mxu0 0
      %338 = vmatpush1.bf16.msra.mxu0 0
      %339 = vmatprep.subr.bf16.mxu0 0
      %340 = vmatpush1.bf16.msra.mxu0 0
      %341 = vmatprep.subr.bf16.mxu0 0
      %342 = vmatpush1.bf16.msra.mxu0 0
      %343 = vmatprep.subr.bf16.mxu0 0
      %344 = vmatpush1.bf16.msra.mxu0 0
      %345 = vmatprep.mubr.bf16.mxu0 0
      %346 = vmatmul.mubr.bf16.gmra.mrb[0].mxu0 %v302
      %v347 = vpop.f32.mrb[0].mxu0
      %v348 = vadd.f32 0.0, %v347
      %v349 = vpop.f32.mrb[0].mxu0
      %v350 = vpop.f32.mrb[0].mxu0
      %v351 = vadd.f32 0.0, %v350
      %v352 = vpop.f32.mrb[0].mxu0
      %353 = vmatprep.mubr.bf16.mxu0 0
      %354 = vmatmul.mubr.bf16.gmra.mrb[0].mxu0 %v305
      %v355 = vpop.f32.mrb[0].mxu0
      %v356 = vadd.f32 0.0, %v355
      %v357 = vpop.f32.mrb[0].mxu0
      %v358 = vpop.f32.mrb[0].mxu0
      %v359 = vadd.f32 0.0, %v358
      %v360 = vpop.f32.mrb[0].mxu0
      %361 = vmatprep.mubr.bf16.mxu0 0
      %362 = vmatmul.mubr.bf16.gmra.mrb[0].mxu0 %v308
      %v363 = vpop.f32.mrb[0].mxu0
      %v364 = vadd.f32 0.0, %v363
      %v365 = vpop.f32.mrb[0].mxu0
      %v366 = vpop.f32.mrb[0].mxu0
      %v367 = vadd.f32 0.0, %v366
      %v368 = vpop.f32.mrb[0].mxu0
      %369 = vmatprep.mubr.bf16.mxu0 0
      %370 = vmatmul.mubr.bf16.gmra.mrb[0].mxu0 %v311
      %v371 = vpop.f32.mrb[0].mxu0
      %v372 = vadd.f32 0.0, %v371
      %v373 = vpop.f32.mrb[0].mxu0
      %v374 = vpop.f32.mrb[0].mxu0
      %v375 = vadd.f32 0.0, %v374
      %v376 = vpop.f32.mrb[0].mxu0
      %377 = vdwg.mxu0
      %v378 = vld [vmem:[%s4] sm:$0x1]
      %v379 = vld [vmem:[%s5] sm:$0xff]
      %v380 = vld [vmem:[%s5 + $0x8] sm:$0xff]
      %v381 = vld [vmem:[%s5 + $0x10] sm:$0xff]
      %v382 = vld [vmem:[%s5 + $0x18] sm:$0xff]
      %v383 = vmul.f32 %v348, %v348
      %v384 = vmul.f32 %v351, %v351
      %v385 = vmul.f32 %v356, %v356
      %v386 = vmul.f32 %v359, %v359
      %v387 = vmul.f32 %v364, %v364
      %v388 = vmul.f32 %v367, %v367
      %v389 = vmul.f32 %v372, %v372
      %v390 = vmul.f32 %v375, %v375
      %v391 = vsel %vm300, %v383, 0.0
      %v392 = vsel %vm300, %v384, 0.0
      %v393 = vadd.f32 %v391, %v392
      %v394 = vrot.slane %v393, 4
      %v395 = vadd.f32 %v393, %v394
      %v396 = vrot.slane %v395, 2
      %v397 = vadd.f32 %v395, %v396
      %v398 = vrot.slane %v397, 1
      %v399 = vadd.f32 %v397, %v398
      %v400 = vsel %vm300, %v385, 0.0
      %v401 = vsel %vm300, %v386, 0.0
      %v402 = vadd.f32 %v400, %v401
      %v403 = vrot.slane %v402, 4
      %v404 = vadd.f32 %v402, %v403
      %v405 = vrot.slane %v404, 2
      %v406 = vadd.f32 %v404, %v405
      %v407 = vrot.slane %v406, 1
      %v408 = vadd.f32 %v406, %v407
      %v409 = vsel %vm300, %v387, 0.0
      %v410 = vsel %vm300, %v388, 0.0
      %v411 = vadd.f32 %v409, %v410
      %v412 = vrot.slane %v411, 4
      %v413 = vadd.f32 %v411, %v412
      %v414 = vrot.slane %v413, 2
      %v415 = vadd.f32 %v413, %v414
      %v416 = vrot.slane %v415, 1
      %v417 = vadd.f32 %v415, %v416
      %v418 = vsel %vm300, %v389, 0.0
      %v419 = vsel %vm300, %v390, 0.0
      %v420 = vadd.f32 %v418, %v419
      %v421 = vrot.slane %v420, 4
      %v422 = vadd.f32 %v420, %v421
      %v423 = vrot.slane %v422, 2
      %v424 = vadd.f32 %v422, %v423
      %v425 = vrot.slane %v424, 1
      %v426 = vadd.f32 %v424, %v425
      %v427 = vmax.f32 %v399, 1e-24
      %v428 = vmax.f32 %v408, 1e-24
      %v429 = vmax.f32 %v417, 1e-24
      %v430 = vmax.f32 %v426, 1e-24
      %v431 = vrsqrt.pop %v427
      %v432 = vrsqrt.pop %v428
      %v433 = vrsqrt.pop %v429
      %v434 = vrsqrt.pop %v430
      %v435 = vmul.f32 %v348, %v431
      %v436 = vmul.f32 %v351, %v431
      %v437 = vmul.f32 %v356, %v432
      %v438 = vmul.f32 %v359, %v432
      %v439 = vmul.f32 %v364, %v433
      %v440 = vmul.f32 %v367, %v433
      %v441 = vmul.f32 %v372, %v434
      %v442 = vmul.f32 %v375, %v434
      %vm443 = vcmask 523520
      %v444 = vsel %vm443, %v383, 0.0
      %v445 = vsel %vm443, %v384, 0.0
      %v446 = vadd.f32 %v444, %v445
      %v447 = vrot.slane %v446, 4
      %v448 = vadd.f32 %v446, %v447
      %v449 = vrot.slane %v448, 2
      %v450 = vadd.f32 %v448, %v449
      %v451 = vrot.slane %v450, 1
      %v452 = vadd.f32 %v450, %v451
      %v453 = vsel %vm443, %v385, 0.0
      %v454 = vsel %vm443, %v386, 0.0
      %v455 = vadd.f32 %v453, %v454
      %v456 = vrot.slane %v455, 4
      %v457 = vadd.f32 %v455, %v456
      %v458 = vrot.slane %v457, 2
      %v459 = vadd.f32 %v457, %v458
      %v460 = vrot.slane %v459, 1
      %v461 = vadd.f32 %v459, %v460
      %v462 = vsel %vm443, %v387, 0.0
      %v463 = vsel %vm443, %v388, 0.0
      %v464 = vadd.f32 %v462, %v463
      %v465 = vrot.slane %v464, 4
      %v466 = vadd.f32 %v464, %v465
      %v467 = vrot.slane %v466, 2
      %v468 = vadd.f32 %v466, %v467
      %v469 = vrot.slane %v468, 1
      %v470 = vadd.f32 %v468, %v469
      %v471 = vsel %vm443, %v389, 0.0
      %v472 = vsel %vm443, %v390, 0.0
      %v473 = vadd.f32 %v471, %v472
      %v474 = vrot.slane %v473, 4
      %v475 = vadd.f32 %v473, %v474
      %v476 = vrot.slane %v475, 2
      %v477 = vadd.f32 %v475, %v476
      %v478 = vrot.slane %v477, 1
      %v479 = vadd.f32 %v477, %v478
      %v480 = vmax.f32 %v452, 1e-24
      %v481 = vmax.f32 %v461, 1e-24
      %v482 = vmax.f32 %v470, 1e-24
      %v483 = vmax.f32 %v479, 1e-24
      %v484 = vrsqrt.pop %v480
      %v485 = vrsqrt.pop %v481
      %v486 = vrsqrt.pop %v482
      %v487 = vrsqrt.pop %v483
      %v488 = vmul.f32 %v348, %v484
      %v489 = vmul.f32 %v351, %v484
      %v490 = vmul.f32 %v356, %v485
      %v491 = vmul.f32 %v359, %v485
      %v492 = vmul.f32 %v364, %v486
      %v493 = vmul.f32 %v367, %v486
      %v494 = vmul.f32 %v372, %v487
      %v495 = vmul.f32 %v375, %v487
      %v497 = vlaneseq
      %v498 = vshrl.u32 %v497, 7
      %v499 = vsub.s32 0, %v498
      %v500 = vrot.slane %v378, %v499
      %v502 = vmul.f32 %v435, %v500
      %v503 = vmul.f32 %v436, %v500
      %v504 = vmul.f32 %v437, %v500
      %v505 = vmul.f32 %v438, %v500
      %v506 = vmul.f32 %v439, %v500
      %v507 = vmul.f32 %v440, %v500
      %v508 = vmul.f32 %v441, %v500
      %v509 = vmul.f32 %v442, %v500
      %510 = vxpose.xlu0.b32.start [1/16] %v502, 128
      %511 = vxpose.xlu0.b32.cont [2/16] %v503, 128
      %512 = vxpose.xlu0.b32.cont [3/16] 0.0, 128
      %513 = vxpose.xlu0.b32.cont [4/16] 0.0, 128
      %514 = vxpose.xlu0.b32.cont [5/16] 0.0, 128
      %515 = vxpose.xlu0.b32.cont [6/16] 0.0, 128
      %516 = vxpose.xlu0.b32.cont [7/16] 0.0, 128
      %517 = vxpose.xlu0.b32.cont [8/16] 0.0, 128
      %518 = vxpose.xlu0.b32.cont [9/16] 0.0, 128
      %519 = vxpose.xlu0.b32.cont [10/16] 0.0, 128
      %520 = vxpose.xlu0.b32.cont [11/16] 0.0, 128
      %521 = vxpose.xlu0.b32.cont [12/16] 0.0, 128
      %522 = vxpose.xlu0.b32.cont [13/16] 0.0, 128
      %523 = vxpose.xlu0.b32.cont [14/16] 0.0, 128
      %524 = vxpose.xlu0.b32.cont [15/16] 0.0, 128
      %525 = vxpose.xlu0.b32.end [16/16] 0.0, 128
      %v526 = vpop.trf.xlu0
      %v527 = vpop.trf.xlu0
      %v528 = vpop.trf.xlu0
      %v529 = vpop.trf.xlu0
      %v530 = vpop.trf.xlu0
      %v531 = vpop.trf.xlu0
      %v532 = vpop.trf.xlu0
      %v533 = vpop.trf.xlu0
      %v534 = vpop.trf.xlu0
      %v535 = vpop.trf.xlu0
      %v536 = vpop.trf.xlu0
      %v537 = vpop.trf.xlu0
      %v538 = vpop.trf.xlu0
      %v539 = vpop.trf.xlu0
      %v540 = vpop.trf.xlu0
      %v541 = vpop.trf.xlu0
      %544 = vrot.lane.b32.xlu0 %v488, 96
      %v545 = vpop.permute.xlu0 %544
      %546 = vrot.lane.b32.xlu0 %v489, 96
      %v547 = vpop.permute.xlu0 %546
      %vm550 = vcmask 130048
      %v552 = vsel %vm550, %v526, 0
      %v555 = vsel %vm550, %v527, 0
      %v558 = vsel %vm550, %v528, 0
      %v561 = vsel %vm550, %v529, 0
      %563 = vmatprep.subr.mxu0 0.0
      %564 = vmatpush1.msra.mxu0 %v545
      %565 = vmatprep.subr.mxu0 0.0
      %566 = vmatpush1.msra.mxu0 %v547
      %567 = vmatprep.subr.mxu0 0.0
      %568 = vmatpush1.msra.mxu0 0.0
      %569 = vmatprep.subr.mxu0 0.0
      %570 = vmatpush1.msra.mxu0 0.0
      %571 = vmatprep.subr.mxu0 0.0
      %572 = vmatpush1.msra.mxu0 0.0
      %573 = vmatprep.subr.mxu0 0.0
      %574 = vmatpush1.msra.mxu0 0.0
      %575 = vmatprep.subr.mxu0 0.0
      %576 = vmatpush1.msra.mxu0 0.0
      %577 = vmatprep.subr.mxu0 0.0
      %578 = vmatpush1.msra.mxu0 0.0
      %579 = vmatprep.subr.mxu0 0.0
      %580 = vmatpush1.msra.mxu0 0.0
      %581 = vmatprep.subr.mxu0 0.0
      %582 = vmatpush1.msra.mxu0 0.0
      %583 = vmatprep.subr.mxu0 0.0
      %584 = vmatpush1.msra.mxu0 0.0
      %585 = vmatprep.subr.mxu0 0.0
      %586 = vmatpush1.msra.mxu0 0.0
      %587 = vmatprep.subr.mxu0 0.0
      %588 = vmatpush1.msra.mxu0 0.0
      %589 = vmatprep.subr.mxu0 0.0
      %590 = vmatpush1.msra.mxu0 0.0
      %591 = vmatprep.subr.mxu0 0.0
      %592 = vmatpush1.msra.mxu0 0.0
      %593 = vmatprep.subr.mxu0 0.0
      %594 = vmatpush1.msra.mxu0 0.0
      %595 = vmatprep.subr.mxu0 0.0
      %596 = vmatpush1.msra.mxu0 0.0
      %597 = vmatprep.subr.mxu0 0.0
      %598 = vmatpush1.msra.mxu0 0.0
      %599 = vmatprep.subr.mxu0 0.0
      %600 = vmatpush1.msra.mxu0 0.0
      %601 = vmatprep.subr.mxu0 0.0
      %602 = vmatpush1.msra.mxu0 0.0
      %603 = vmatprep.subr.mxu0 0.0
      %604 = vmatpush1.msra.mxu0 0.0
      %605 = vmatprep.subr.mxu0 0.0
      %606 = vmatpush1.msra.mxu0 0.0
      %607 = vmatprep.subr.mxu0 0.0
      %608 = vmatpush1.msra.mxu0 0.0
      %609 = vmatprep.subr.mxu0 0.0
      %610 = vmatpush1.msra.mxu0 0.0
      %611 = vmatprep.subr.mxu0 0.0
      %612 = vmatpush1.msra.mxu0 0.0
      %613 = vmatprep.subr.mxu0 0.0
      %614 = vmatpush1.msra.mxu0 0.0
      %615 = vmatprep.subr.mxu0 0.0
      %616 = vmatpush1.msra.mxu0 0.0
      %617 = vmatprep.subr.mxu0 0.0
      %618 = vmatpush1.msra.mxu0 0.0
      %619 = vmatprep.subr.mxu0 0.0
      %620 = vmatpush1.msra.mxu0 0.0
      %621 = vmatprep.subr.mxu0 0.0
      %622 = vmatpush1.msra.mxu0 0.0
      %623 = vmatprep.subr.mxu0 0.0
      %624 = vmatpush1.msra.mxu0 0.0
      %625 = vmatprep.subr.mxu0 0.0
      %626 = vmatpush1.msra.mxu0 0.0
      %627 = vmatprep.mubr.f32.mxu0 0.0
      %628 = vmatmul.mubr.f32.gmra.mrb[0].mxu0 %v552
      %v629 = vpop.f32.mrb[0].mxu0
      %v630 = vadd.f32 %v379, %v629
      %v631 = vpop.f32.mrb[0].mxu0
      %632 = vmatprep.mubr.f32.mxu0 0.0
      %633 = vmatmul.mubr.f32.gmra.mrb[0].mxu0 %v555
      %v634 = vpop.f32.mrb[0].mxu0
      %v635 = vadd.f32 %v380, %v634
      %v636 = vpop.f32.mrb[0].mxu0
      %637 = vmatprep.mubr.f32.mxu0 0.0
      %638 = vmatmul.mubr.f32.gmra.mrb[0].mxu0 %v558
      %v639 = vpop.f32.mrb[0].mxu0
      %v640 = vadd.f32 %v381, %v639
      %v641 = vpop.f32.mrb[0].mxu0
      %642 = vmatprep.mubr.f32.mxu0 0.0
      %643 = vmatmul.mubr.f32.gmra.mrb[0].mxu0 %v561
      %v644 = vpop.f32.mrb[0].mxu0
      %v645 = vadd.f32 %v382, %v644
      %v646 = vpop.f32.mrb[0].mxu0
      %647 = vdwg.mxu0
      %648 = vxpose.xlu0.b32.start [1/16] %v504, 128
      %649 = vxpose.xlu0.b32.cont [2/16] %v505, 128
      %650 = vxpose.xlu0.b32.cont [3/16] 0.0, 128
      %651 = vxpose.xlu0.b32.cont [4/16] 0.0, 128
      %652 = vxpose.xlu0.b32.cont [5/16] 0.0, 128
      %653 = vxpose.xlu0.b32.cont [6/16] 0.0, 128
      %654 = vxpose.xlu0.b32.cont [7/16] 0.0, 128
      %655 = vxpose.xlu0.b32.cont [8/16] 0.0, 128
      %656 = vxpose.xlu0.b32.cont [9/16] 0.0, 128
      %657 = vxpose.xlu0.b32.cont [10/16] 0.0, 128
      %658 = vxpose.xlu0.b32.cont [11/16] 0.0, 128
      %659 = vxpose.xlu0.b32.cont [12/16] 0.0, 128
      %660 = vxpose.xlu0.b32.cont [13/16] 0.0, 128
      %661 = vxpose.xlu0.b32.cont [14/16] 0.0, 128
      %662 = vxpose.xlu0.b32.cont [15/16] 0.0, 128
      %663 = vxpose.xlu0.b32.end [16/16] 0.0, 128
      %v664 = vpop.trf.xlu0
      %v665 = vpop.trf.xlu0
      %v666 = vpop.trf.xlu0
      %v667 = vpop.trf.xlu0
      %v668 = vpop.trf.xlu0
      %v669 = vpop.trf.xlu0
      %v670 = vpop.trf.xlu0
      %v671 = vpop.trf.xlu0
      %v672 = vpop.trf.xlu0
      %v673 = vpop.trf.xlu0
      %v674 = vpop.trf.xlu0
      %v675 = vpop.trf.xlu0
      %v676 = vpop.trf.xlu0
      %v677 = vpop.trf.xlu0
      %v678 = vpop.trf.xlu0
      %v679 = vpop.trf.xlu0
      %682 = vrot.lane.b32.xlu0 %v490, 96
      %v683 = vpop.permute.xlu0 %682
      %684 = vrot.lane.b32.xlu0 %v491, 96
      %v685 = vpop.permute.xlu0 %684
      %v689 = vsel %vm550, %v664, 0
      %v692 = vsel %vm550, %v665, 0
      %v695 = vsel %vm550, %v666, 0
      %v698 = vsel %vm550, %v667, 0
      %700 = vmatprep.subr.mxu0 0.0
      %701 = vmatpush1.msra.mxu0 %v683
      %702 = vmatprep.subr.mxu0 0.0
      %703 = vmatpush1.msra.mxu0 %v685
      %704 = vmatprep.subr.mxu0 0.0
      %705 = vmatpush1.msra.mxu0 0.0
      %706 = vmatprep.subr.mxu0 0.0
      %707 = vmatpush1.msra.mxu0 0.0
      %708 = vmatprep.subr.mxu0 0.0
      %709 = vmatpush1.msra.mxu0 0.0
      %710 = vmatprep.subr.mxu0 0.0
      %711 = vmatpush1.msra.mxu0 0.0
      %712 = vmatprep.subr.mxu0 0.0
      %713 = vmatpush1.msra.mxu0 0.0
      %714 = vmatprep.subr.mxu0 0.0
      %715 = vmatpush1.msra.mxu0 0.0
      %716 = vmatprep.subr.mxu0 0.0
      %717 = vmatpush1.msra.mxu0 0.0
      %718 = vmatprep.subr.mxu0 0.0
      %719 = vmatpush1.msra.mxu0 0.0
      %720 = vmatprep.subr.mxu0 0.0
      %721 = vmatpush1.msra.mxu0 0.0
      %722 = vmatprep.subr.mxu0 0.0
      %723 = vmatpush1.msra.mxu0 0.0
      %724 = vmatprep.subr.mxu0 0.0
      %725 = vmatpush1.msra.mxu0 0.0
      %726 = vmatprep.subr.mxu0 0.0
      %727 = vmatpush1.msra.mxu0 0.0
      %728 = vmatprep.subr.mxu0 0.0
      %729 = vmatpush1.msra.mxu0 0.0
      %730 = vmatprep.subr.mxu0 0.0
      %731 = vmatpush1.msra.mxu0 0.0
      %732 = vmatprep.subr.mxu0 0.0
      %733 = vmatpush1.msra.mxu0 0.0
      %734 = vmatprep.subr.mxu0 0.0
      %735 = vmatpush1.msra.mxu0 0.0
      %736 = vmatprep.subr.mxu0 0.0
      %737 = vmatpush1.msra.mxu0 0.0
      %738 = vmatprep.subr.mxu0 0.0
      %739 = vmatpush1.msra.mxu0 0.0
      %740 = vmatprep.subr.mxu0 0.0
      %741 = vmatpush1.msra.mxu0 0.0
      %742 = vmatprep.subr.mxu0 0.0
      %743 = vmatpush1.msra.mxu0 0.0
      %744 = vmatprep.subr.mxu0 0.0
      %745 = vmatpush1.msra.mxu0 0.0
      %746 = vmatprep.subr.mxu0 0.0
      %747 = vmatpush1.msra.mxu0 0.0
      %748 = vmatprep.subr.mxu0 0.0
      %749 = vmatpush1.msra.mxu0 0.0
      %750 = vmatprep.subr.mxu0 0.0
      %751 = vmatpush1.msra.mxu0 0.0
      %752 = vmatprep.subr.mxu0 0.0
      %753 = vmatpush1.msra.mxu0 0.0
      %754 = vmatprep.subr.mxu0 0.0
      %755 = vmatpush1.msra.mxu0 0.0
      %756 = vmatprep.subr.mxu0 0.0
      %757 = vmatpush1.msra.mxu0 0.0
      %758 = vmatprep.subr.mxu0 0.0
      %759 = vmatpush1.msra.mxu0 0.0
      %760 = vmatprep.subr.mxu0 0.0
      %761 = vmatpush1.msra.mxu0 0.0
      %762 = vmatprep.subr.mxu0 0.0
      %763 = vmatpush1.msra.mxu0 0.0
      %764 = vmatprep.mubr.f32.mxu0 0.0
      %765 = vmatmul.mubr.f32.gmra.mrb[0].mxu0 %v689
      %v766 = vpop.f32.mrb[0].mxu0
      %v767 = vadd.f32 %v379, %v766
      %v768 = vpop.f32.mrb[0].mxu0
      %769 = vmatprep.mubr.f32.mxu0 0.0
      %770 = vmatmul.mubr.f32.gmra.mrb[0].mxu0 %v692
      %v771 = vpop.f32.mrb[0].mxu0
      %v772 = vadd.f32 %v380, %v771
      %v773 = vpop.f32.mrb[0].mxu0
      %774 = vmatprep.mubr.f32.mxu0 0.0
      %775 = vmatmul.mubr.f32.gmra.mrb[0].mxu0 %v695
      %v776 = vpop.f32.mrb[0].mxu0
      %v777 = vadd.f32 %v381, %v776
      %v778 = vpop.f32.mrb[0].mxu0
      %779 = vmatprep.mubr.f32.mxu0 0.0
      %780 = vmatmul.mubr.f32.gmra.mrb[0].mxu0 %v698
      %v781 = vpop.f32.mrb[0].mxu0
      %v782 = vadd.f32 %v382, %v781
      %v783 = vpop.f32.mrb[0].mxu0
      %784 = vdwg.mxu0
      %785 = vxpose.xlu0.b32.start [1/16] %v506, 128
      %786 = vxpose.xlu0.b32.cont [2/16] %v507, 128
      %787 = vxpose.xlu0.b32.cont [3/16] 0.0, 128
      %788 = vxpose.xlu0.b32.cont [4/16] 0.0, 128
      %789 = vxpose.xlu0.b32.cont [5/16] 0.0, 128
      %790 = vxpose.xlu0.b32.cont [6/16] 0.0, 128
      %791 = vxpose.xlu0.b32.cont [7/16] 0.0, 128
      %792 = vxpose.xlu0.b32.cont [8/16] 0.0, 128
      %793 = vxpose.xlu0.b32.cont [9/16] 0.0, 128
      %794 = vxpose.xlu0.b32.cont [10/16] 0.0, 128
      %795 = vxpose.xlu0.b32.cont [11/16] 0.0, 128
      %796 = vxpose.xlu0.b32.cont [12/16] 0.0, 128
      %797 = vxpose.xlu0.b32.cont [13/16] 0.0, 128
      %798 = vxpose.xlu0.b32.cont [14/16] 0.0, 128
      %799 = vxpose.xlu0.b32.cont [15/16] 0.0, 128
      %800 = vxpose.xlu0.b32.end [16/16] 0.0, 128
      %v801 = vpop.trf.xlu0
      %v802 = vpop.trf.xlu0
      %v803 = vpop.trf.xlu0
      %v804 = vpop.trf.xlu0
      %v805 = vpop.trf.xlu0
      %v806 = vpop.trf.xlu0
      %v807 = vpop.trf.xlu0
      %v808 = vpop.trf.xlu0
      %v809 = vpop.trf.xlu0
      %v810 = vpop.trf.xlu0
      %v811 = vpop.trf.xlu0
      %v812 = vpop.trf.xlu0
      %v813 = vpop.trf.xlu0
      %v814 = vpop.trf.xlu0
      %v815 = vpop.trf.xlu0
      %v816 = vpop.trf.xlu0
      %819 = vrot.lane.b32.xlu0 %v492, 96
      %v820 = vpop.permute.xlu0 %819
      %821 = vrot.lane.b32.xlu0 %v493, 96
      %v822 = vpop.permute.xlu0 %821
      %v826 = vsel %vm550, %v801, 0
      %v829 = vsel %vm550, %v802, 0
      %v832 = vsel %vm550, %v803, 0
      %v835 = vsel %vm550, %v804, 0
      %837 = vmatprep.subr.mxu0 0.0
      %838 = vmatpush1.msra.mxu0 %v820
      %839 = vmatprep.subr.mxu0 0.0
      %840 = vmatpush1.msra.mxu0 %v822
      %841 = vmatprep.subr.mxu0 0.0
      %842 = vmatpush1.msra.mxu0 0.0
      %843 = vmatprep.subr.mxu0 0.0
      %844 = vmatpush1.msra.mxu0 0.0
      %845 = vmatprep.subr.mxu0 0.0
      %846 = vmatpush1.msra.mxu0 0.0
      %847 = vmatprep.subr.mxu0 0.0
      %848 = vmatpush1.msra.mxu0 0.0
      %849 = vmatprep.subr.mxu0 0.0
      %850 = vmatpush1.msra.mxu0 0.0
      %851 = vmatprep.subr.mxu0 0.0
      %852 = vmatpush1.msra.mxu0 0.0
      %853 = vmatprep.subr.mxu0 0.0
      %854 = vmatpush1.msra.mxu0 0.0
      %855 = vmatprep.subr.mxu0 0.0
      %856 = vmatpush1.msra.mxu0 0.0
      %857 = vmatprep.subr.mxu0 0.0
      %858 = vmatpush1.msra.mxu0 0.0
      %859 = vmatprep.subr.mxu0 0.0
      %860 = vmatpush1.msra.mxu0 0.0
      %861 = vmatprep.subr.mxu0 0.0
      %862 = vmatpush1.msra.mxu0 0.0
      %863 = vmatprep.subr.mxu0 0.0
      %864 = vmatpush1.msra.mxu0 0.0
      %865 = vmatprep.subr.mxu0 0.0
      %866 = vmatpush1.msra.mxu0 0.0
      %867 = vmatprep.subr.mxu0 0.0
      %868 = vmatpush1.msra.mxu0 0.0
      %869 = vmatprep.subr.mxu0 0.0
      %870 = vmatpush1.msra.mxu0 0.0
      %871 = vmatprep.subr.mxu0 0.0
      %872 = vmatpush1.msra.mxu0 0.0
      %873 = vmatprep.subr.mxu0 0.0
      %874 = vmatpush1.msra.mxu0 0.0
      %875 = vmatprep.subr.mxu0 0.0
      %876 = vmatpush1.msra.mxu0 0.0
      %877 = vmatprep.subr.mxu0 0.0
      %878 = vmatpush1.msra.mxu0 0.0
      %879 = vmatprep.subr.mxu0 0.0
      %880 = vmatpush1.msra.mxu0 0.0
      %881 = vmatprep.subr.mxu0 0.0
      %882 = vmatpush1.msra.mxu0 0.0
      %883 = vmatprep.subr.mxu0 0.0
      %884 = vmatpush1.msra.mxu0 0.0
      %885 = vmatprep.subr.mxu0 0.0
      %886 = vmatpush1.msra.mxu0 0.0
      %887 = vmatprep.subr.mxu0 0.0
      %888 = vmatpush1.msra.mxu0 0.0
      %889 = vmatprep.subr.mxu0 0.0
      %890 = vmatpush1.msra.mxu0 0.0
      %891 = vmatprep.subr.mxu0 0.0
      %892 = vmatpush1.msra.mxu0 0.0
      %893 = vmatprep.subr.mxu0 0.0
      %894 = vmatpush1.msra.mxu0 0.0
      %895 = vmatprep.subr.mxu0 0.0
      %896 = vmatpush1.msra.mxu0 0.0
      %897 = vmatprep.subr.mxu0 0.0
      %898 = vmatpush1.msra.mxu0 0.0
      %899 = vmatprep.subr.mxu0 0.0
      %900 = vmatpush1.msra.mxu0 0.0
      %901 = vmatprep.mubr.f32.mxu0 0.0
      %902 = vmatmul.mubr.f32.gmra.mrb[0].mxu0 %v826
      %v903 = vpop.f32.mrb[0].mxu0
      %v904 = vadd.f32 %v379, %v903
      %v905 = vpop.f32.mrb[0].mxu0
      %906 = vmatprep.mubr.f32.mxu0 0.0
      %907 = vmatmul.mubr.f32.gmra.mrb[0].mxu0 %v829
      %v908 = vpop.f32.mrb[0].mxu0
      %v909 = vadd.f32 %v380, %v908
      %v910 = vpop.f32.mrb[0].mxu0
      %911 = vmatprep.mubr.f32.mxu0 0.0
      %912 = vmatmul.mubr.f32.gmra.mrb[0].mxu0 %v832
      %v913 = vpop.f32.mrb[0].mxu0
      %v914 = vadd.f32 %v381, %v913
      %v915 = vpop.f32.mrb[0].mxu0
      %916 = vmatprep.mubr.f32.mxu0 0.0
      %917 = vmatmul.mubr.f32.gmra.mrb[0].mxu0 %v835
      %v918 = vpop.f32.mrb[0].mxu0
      %v919 = vadd.f32 %v382, %v918
      %v920 = vpop.f32.mrb[0].mxu0
      %921 = vdwg.mxu0
      %922 = vxpose.xlu0.b32.start [1/16] %v508, 128
      %923 = vxpose.xlu0.b32.cont [2/16] %v509, 128
      %924 = vxpose.xlu0.b32.cont [3/16] 0.0, 128
      %925 = vxpose.xlu0.b32.cont [4/16] 0.0, 128
      %926 = vxpose.xlu0.b32.cont [5/16] 0.0, 128
      %927 = vxpose.xlu0.b32.cont [6/16] 0.0, 128
      %928 = vxpose.xlu0.b32.cont [7/16] 0.0, 128
      %929 = vxpose.xlu0.b32.cont [8/16] 0.0, 128
      %930 = vxpose.xlu0.b32.cont [9/16] 0.0, 128
      %931 = vxpose.xlu0.b32.cont [10/16] 0.0, 128
      %932 = vxpose.xlu0.b32.cont [11/16] 0.0, 128
      %933 = vxpose.xlu0.b32.cont [12/16] 0.0, 128
      %934 = vxpose.xlu0.b32.cont [13/16] 0.0, 128
      %935 = vxpose.xlu0.b32.cont [14/16] 0.0, 128
      %936 = vxpose.xlu0.b32.cont [15/16] 0.0, 128
      %937 = vxpose.xlu0.b32.end [16/16] 0.0, 128
      %v938 = vpop.trf.xlu0
      %v939 = vpop.trf.xlu0
      %v940 = vpop.trf.xlu0
      %v941 = vpop.trf.xlu0
      %v942 = vpop.trf.xlu0
      %v943 = vpop.trf.xlu0
      %v944 = vpop.trf.xlu0
      %v945 = vpop.trf.xlu0
      %v946 = vpop.trf.xlu0
      %v947 = vpop.trf.xlu0
      %v948 = vpop.trf.xlu0
      %v949 = vpop.trf.xlu0
      %v950 = vpop.trf.xlu0
      %v951 = vpop.trf.xlu0
      %v952 = vpop.trf.xlu0
      %v953 = vpop.trf.xlu0
      %956 = vrot.lane.b32.xlu0 %v494, 96
      %v957 = vpop.permute.xlu0 %956
      %958 = vrot.lane.b32.xlu0 %v495, 96
      %v959 = vpop.permute.xlu0 %958
      %v963 = vsel %vm550, %v938, 0
      %v966 = vsel %vm550, %v939, 0
      %v969 = vsel %vm550, %v940, 0
      %v972 = vsel %vm550, %v941, 0
      %974 = vmatprep.subr.mxu0 0.0
      %975 = vmatpush1.msra.mxu0 %v957
      %976 = vmatprep.subr.mxu0 0.0
      %977 = vmatpush1.msra.mxu0 %v959
      %978 = vmatprep.subr.mxu0 0.0
      %979 = vmatpush1.msra.mxu0 0.0
      %980 = vmatprep.subr.mxu0 0.0
      %981 = vmatpush1.msra.mxu0 0.0
      %982 = vmatprep.subr.mxu0 0.0
      %983 = vmatpush1.msra.mxu0 0.0
      %984 = vmatprep.subr.mxu0 0.0
      %985 = vmatpush1.msra.mxu0 0.0
      %986 = vmatprep.subr.mxu0 0.0
      %987 = vmatpush1.msra.mxu0 0.0
      %988 = vmatprep.subr.mxu0 0.0
      %989 = vmatpush1.msra.mxu0 0.0
      %990 = vmatprep.subr.mxu0 0.0
      %991 = vmatpush1.msra.mxu0 0.0
      %992 = vmatprep.subr.mxu0 0.0
      %993 = vmatpush1.msra.mxu0 0.0
      %994 = vmatprep.subr.mxu0 0.0
      %995 = vmatpush1.msra.mxu0 0.0
      %996 = vmatprep.subr.mxu0 0.0
      %997 = vmatpush1.msra.mxu0 0.0
      %998 = vmatprep.subr.mxu0 0.0
      %999 = vmatpush1.msra.mxu0 0.0
      %1000 = vmatprep.subr.mxu0 0.0
      %1001 = vmatpush1.msra.mxu0 0.0
      %1002 = vmatprep.subr.mxu0 0.0
      %1003 = vmatpush1.msra.mxu0 0.0
      %1004 = vmatprep.subr.mxu0 0.0
      %1005 = vmatpush1.msra.mxu0 0.0
      %1006 = vmatprep.subr.mxu0 0.0
      %1007 = vmatpush1.msra.mxu0 0.0
      %1008 = vmatprep.subr.mxu0 0.0
      %1009 = vmatpush1.msra.mxu0 0.0
      %1010 = vmatprep.subr.mxu0 0.0
      %1011 = vmatpush1.msra.mxu0 0.0
      %1012 = vmatprep.subr.mxu0 0.0
      %1013 = vmatpush1.msra.mxu0 0.0
      %1014 = vmatprep.subr.mxu0 0.0
      %1015 = vmatpush1.msra.mxu0 0.0
      %1016 = vmatprep.subr.mxu0 0.0
      %1017 = vmatpush1.msra.mxu0 0.0
      %1018 = vmatprep.subr.mxu0 0.0
      %1019 = vmatpush1.msra.mxu0 0.0
      %1020 = vmatprep.subr.mxu0 0.0
      %1021 = vmatpush1.msra.mxu0 0.0
      %1022 = vmatprep.subr.mxu0 0.0
      %1023 = vmatpush1.msra.mxu0 0.0
      %1024 = vmatprep.subr.mxu0 0.0
      %1025 = vmatpush1.msra.mxu0 0.0
      %1026 = vmatprep.subr.mxu0 0.0
      %1027 = vmatpush1.msra.mxu0 0.0
      %1028 = vmatprep.subr.mxu0 0.0
      %1029 = vmatpush1.msra.mxu0 0.0
      %1030 = vmatprep.subr.mxu0 0.0
      %1031 = vmatpush1.msra.mxu0 0.0
      %1032 = vmatprep.subr.mxu0 0.0
      %1033 = vmatpush1.msra.mxu0 0.0
      %1034 = vmatprep.subr.mxu0 0.0
      %1035 = vmatpush1.msra.mxu0 0.0
      %1036 = vmatprep.subr.mxu0 0.0
      %1037 = vmatpush1.msra.mxu0 0.0
      %1038 = vmatprep.mubr.f32.mxu0 0.0
      %1039 = vmatmul.mubr.f32.gmra.mrb[0].mxu0 %v963
      %v1040 = vpop.f32.mrb[0].mxu0
      %v1041 = vadd.f32 %v379, %v1040
      %v1042 = vpop.f32.mrb[0].mxu0
      %1043 = vmatprep.mubr.f32.mxu0 0.0
      %1044 = vmatmul.mubr.f32.gmra.mrb[0].mxu0 %v966
      %v1045 = vpop.f32.mrb[0].mxu0
      %v1046 = vadd.f32 %v380, %v1045
      %v1047 = vpop.f32.mrb[0].mxu0
      %1048 = vmatprep.mubr.f32.mxu0 0.0
      %1049 = vmatmul.mubr.f32.gmra.mrb[0].mxu0 %v969
      %v1050 = vpop.f32.mrb[0].mxu0
      %v1051 = vadd.f32 %v381, %v1050
      %v1052 = vpop.f32.mrb[0].mxu0
      %1053 = vmatprep.mubr.f32.mxu0 0.0
      %1054 = vmatmul.mubr.f32.gmra.mrb[0].mxu0 %v972
      %v1055 = vpop.f32.mrb[0].mxu0
      %v1056 = vadd.f32 %v382, %v1055
      %v1057 = vpop.f32.mrb[0].mxu0
      %1058 = vdwg.mxu0
      %v1059 = vsel %vm300, %v630, -inf
      %1060 = vmax.xlane.f32.xlu0 %v1059
      %v1061 = vpop.xlane.xlu0 %1060
      %v1062 = vsel %vm300, %v635, -inf
      %1063 = vmax.xlane.f32.xlu0 %v1062
      %v1064 = vpop.xlane.xlu0 %1063
      %v1065 = vsel %vm300, %v640, -inf
      %1066 = vmax.xlane.f32.xlu0 %v1065
      %v1067 = vpop.xlane.xlu0 %1066
      %v1068 = vsel %vm300, %v645, -inf
      %1069 = vmax.xlane.f32.xlu0 %v1068
      %v1070 = vpop.xlane.xlu0 %1069
      %v1071 = vsel %vm300, %v767, -inf
      %1072 = vmax.xlane.f32.xlu0 %v1071
      %v1073 = vpop.xlane.xlu0 %1072
      %v1074 = vsel %vm300, %v772, -inf
      %1075 = vmax.xlane.f32.xlu0 %v1074
      %v1076 = vpop.xlane.xlu0 %1075
      %v1077 = vsel %vm300, %v777, -inf
      %1078 = vmax.xlane.f32.xlu0 %v1077
      %v1079 = vpop.xlane.xlu0 %1078
      %v1080 = vsel %vm300, %v782, -inf
      %1081 = vmax.xlane.f32.xlu0 %v1080
      %v1082 = vpop.xlane.xlu0 %1081
      %v1083 = vsel %vm300, %v904, -inf
      %1084 = vmax.xlane.f32.xlu0 %v1083
      %v1085 = vpop.xlane.xlu0 %1084
      %v1086 = vsel %vm300, %v909, -inf
      %1087 = vmax.xlane.f32.xlu0 %v1086
      %v1088 = vpop.xlane.xlu0 %1087
      %v1089 = vsel %vm300, %v914, -inf
      %1090 = vmax.xlane.f32.xlu0 %v1089
      %v1091 = vpop.xlane.xlu0 %1090
      %v1092 = vsel %vm300, %v919, -inf
      %1093 = vmax.xlane.f32.xlu0 %v1092
      %v1094 = vpop.xlane.xlu0 %1093
      %v1095 = vsel %vm300, %v1041, -inf
      %1096 = vmax.xlane.f32.xlu0 %v1095
      %v1097 = vpop.xlane.xlu0 %1096
      %v1098 = vsel %vm300, %v1046, -inf
      %1099 = vmax.xlane.f32.xlu0 %v1098
      %v1100 = vpop.xlane.xlu0 %1099
      %v1101 = vsel %vm300, %v1051, -inf
      %1102 = vmax.xlane.f32.xlu0 %v1101
      %v1103 = vpop.xlane.xlu0 %1102
      %v1104 = vsel %vm300, %v1056, -inf
      %1105 = vmax.xlane.f32.xlu0 %v1104
      %v1106 = vpop.xlane.xlu0 %1105
      %v1107 = vsub.f32 %v630, %v1061
      %v1108 = vsub.f32 %v635, %v1064
      %v1109 = vsub.f32 %v640, %v1067
      %v1110 = vsub.f32 %v645, %v1070
      %v1111 = vsub.f32 %v767, %v1073
      %v1112 = vsub.f32 %v772, %v1076
      %v1113 = vsub.f32 %v777, %v1079
      %v1114 = vsub.f32 %v782, %v1082
      %v1115 = vsub.f32 %v904, %v1085
      %v1116 = vsub.f32 %v909, %v1088
      %v1117 = vsub.f32 %v914, %v1091
      %v1118 = vsub.f32 %v919, %v1094
      %v1119 = vsub.f32 %v1041, %v1097
      %v1120 = vsub.f32 %v1046, %v1100
      %v1121 = vsub.f32 %v1051, %v1103
      %v1122 = vsub.f32 %v1056, %v1106
      %v1123 = vmul.f32 %v1107, 1.442695
      %v1124 = vpow.pop %v1123
      %v1125 = vmul.f32 %v1108, 1.442695
      %v1126 = vpow.pop %v1125
      %v1127 = vmul.f32 %v1109, 1.442695
      %v1128 = vpow.pop %v1127
      %v1129 = vmul.f32 %v1110, 1.442695
      %v1130 = vpow.pop %v1129
      %v1131 = vmul.f32 %v1111, 1.442695
      %v1132 = vpow.pop %v1131
      %v1133 = vmul.f32 %v1112, 1.442695
      %v1134 = vpow.pop %v1133
      %v1135 = vmul.f32 %v1113, 1.442695
      %v1136 = vpow.pop %v1135
      %v1137 = vmul.f32 %v1114, 1.442695
      %v1138 = vpow.pop %v1137
      %v1139 = vmul.f32 %v1115, 1.442695
      %v1140 = vpow.pop %v1139
      %v1141 = vmul.f32 %v1116, 1.442695
      %v1142 = vpow.pop %v1141
      %v1143 = vmul.f32 %v1117, 1.442695
      %v1144 = vpow.pop %v1143
      %v1145 = vmul.f32 %v1118, 1.442695
      %v1146 = vpow.pop %v1145
      %v1147 = vmul.f32 %v1119, 1.442695
      %v1148 = vpow.pop %v1147
      %v1149 = vmul.f32 %v1120, 1.442695
      %v1150 = vpow.pop %v1149
      %v1151 = vmul.f32 %v1121, 1.442695
      %v1152 = vpow.pop %v1151
      %v1153 = vmul.f32 %v1122, 1.442695
      %v1154 = vpow.pop %v1153
      %v1155 = vsel %vm300, %v1124, 0.0
      %1156 = vadd.xlane.f32.xlu0 %v1155
      %v1157 = vpop.xlane.xlu0 %1156
      %v1158 = vsel %vm300, %v1126, 0.0
      %1159 = vadd.xlane.f32.xlu0 %v1158
      %v1160 = vpop.xlane.xlu0 %1159
      %v1161 = vsel %vm300, %v1128, 0.0
      %1162 = vadd.xlane.f32.xlu0 %v1161
      %v1163 = vpop.xlane.xlu0 %1162
      %v1164 = vsel %vm300, %v1130, 0.0
      %1165 = vadd.xlane.f32.xlu0 %v1164
      %v1166 = vpop.xlane.xlu0 %1165
      %v1167 = vsel %vm300, %v1132, 0.0
      %1168 = vadd.xlane.f32.xlu0 %v1167
      %v1169 = vpop.xlane.xlu0 %1168
      %v1170 = vsel %vm300, %v1134, 0.0
      %1171 = vadd.xlane.f32.xlu0 %v1170
      %v1172 = vpop.xlane.xlu0 %1171
      %v1173 = vsel %vm300, %v1136, 0.0
      %1174 = vadd.xlane.f32.xlu0 %v1173
      %v1175 = vpop.xlane.xlu0 %1174
      %v1176 = vsel %vm300, %v1138, 0.0
      %1177 = vadd.xlane.f32.xlu0 %v1176
      %v1178 = vpop.xlane.xlu0 %1177
      %v1179 = vsel %vm300, %v1140, 0.0
      %1180 = vadd.xlane.f32.xlu0 %v1179
      %v1181 = vpop.xlane.xlu0 %1180
      %v1182 = vsel %vm300, %v1142, 0.0
      %1183 = vadd.xlane.f32.xlu0 %v1182
      %v1184 = vpop.xlane.xlu0 %1183
      %v1185 = vsel %vm300, %v1144, 0.0
      %1186 = vadd.xlane.f32.xlu0 %v1185
      %v1187 = vpop.xlane.xlu0 %1186
      %v1188 = vsel %vm300, %v1146, 0.0
      %1189 = vadd.xlane.f32.xlu0 %v1188
      %v1190 = vpop.xlane.xlu0 %1189
      %v1191 = vsel %vm300, %v1148, 0.0
      %1192 = vadd.xlane.f32.xlu0 %v1191
      %v1193 = vpop.xlane.xlu0 %1192
      %v1194 = vsel %vm300, %v1150, 0.0
      %1195 = vadd.xlane.f32.xlu0 %v1194
      %v1196 = vpop.xlane.xlu0 %1195
      %v1197 = vsel %vm300, %v1152, 0.0
      %1198 = vadd.xlane.f32.xlu0 %v1197
      %v1199 = vpop.xlane.xlu0 %1198
      %v1200 = vsel %vm300, %v1154, 0.0
      %1201 = vadd.xlane.f32.xlu0 %v1200
      %v1202 = vpop.xlane.xlu0 %1201
      %v1203 = vrcp.pop %v1157
      %v1204 = vrcp.pop %v1160
      %v1205 = vrcp.pop %v1163
      %v1206 = vrcp.pop %v1166
      %v1207 = vrcp.pop %v1169
      %v1208 = vrcp.pop %v1172
      %v1209 = vrcp.pop %v1175
      %v1210 = vrcp.pop %v1178
      %v1211 = vrcp.pop %v1181
      %v1212 = vrcp.pop %v1184
      %v1213 = vrcp.pop %v1187
      %v1214 = vrcp.pop %v1190
      %v1215 = vrcp.pop %v1193
      %v1216 = vrcp.pop %v1196
      %v1217 = vrcp.pop %v1199
      %v1218 = vrcp.pop %v1202
      %v1219 = vmul.f32 %v1124, %v1203
      %v1220 = vmul.f32 %v1126, %v1204
      %v1221 = vmul.f32 %v1128, %v1205
      %v1222 = vmul.f32 %v1130, %v1206
      %v1223 = vmul.f32 %v1132, %v1207
      %v1224 = vmul.f32 %v1134, %v1208
      %v1225 = vmul.f32 %v1136, %v1209
      %v1226 = vmul.f32 %v1138, %v1210
      %v1227 = vmul.f32 %v1140, %v1211
      %v1228 = vmul.f32 %v1142, %v1212
      %v1229 = vmul.f32 %v1144, %v1213
      %v1230 = vmul.f32 %v1146, %v1214
      %v1231 = vmul.f32 %v1148, %v1215
      %v1232 = vmul.f32 %v1150, %v1216
      %v1233 = vmul.f32 %v1152, %v1217
      %v1234 = vmul.f32 %v1154, %v1218
      %v1235 = vpack.c.bf16 %v351, %v348
      %v1236 = vpack.c.bf16 %v359, %v356
      %v1237 = vpack.c.bf16 %v367, %v364
      %v1238 = vpack.c.bf16 %v375, %v372
      %v1239 = vpack.c.bf16 %v1220, %v1219
      %v1240 = vpack.c.bf16 %v1222, %v1221
      %v1241 = vpack.c.bf16 %v1224, %v1223
      %v1242 = vpack.c.bf16 %v1226, %v1225
      %v1243 = vpack.c.bf16 %v1228, %v1227
      %v1244 = vpack.c.bf16 %v1230, %v1229
      %v1245 = vpack.c.bf16 %v1232, %v1231
      %v1246 = vpack.c.bf16 %v1234, %v1233
      %1248 = vrot.lane.b32.xlu0 %v1235, 64
      %v1249 = vpop.permute.xlu0 %1248
      %v1251 = vsel %vm300, %v1249, 0
      %v1254 = vsel %vm300, %v1239, 0
      %v1257 = vsel %vm300, %v1240, 0
      %1259 = vmatprep.subr.bf16.mxu0 0
      %1260 = vmatpush1.bf16.xpose.msra.mxu0 %v1254
      %1261 = vmatprep.subr.bf16.mxu0 0
      %1262 = vmatpush1.bf16.xpose.msra.mxu0 %v1257
      %1263 = vmatprep.subr.bf16.mxu0 0
      %1264 = vmatpush1.bf16.xpose.msra.mxu0 0
      %1265 = vmatprep.subr.bf16.mxu0 0
      %1266 = vmatpush1.bf16.xpose.msra.mxu0 0
      %1267 = vmatprep.subr.bf16.mxu0 0
      %1268 = vmatpush1.bf16.xpose.msra.mxu0 0
      %1269 = vmatprep.subr.bf16.mxu0 0
      %1270 = vmatpush1.bf16.xpose.msra.mxu0 0
      %1271 = vmatprep.subr.bf16.mxu0 0
      %1272 = vmatpush1.bf16.xpose.msra.mxu0 0
      %1273 = vmatprep.subr.bf16.mxu0 0
      %1274 = vmatpush1.bf16.xpose.msra.mxu0 0
      %1275 = vmatprep.subr.bf16.mxu0 0
      %1276 = vmatpush1.bf16.xpose.msra.mxu0 0
      %1277 = vmatprep.subr.bf16.mxu0 0
      %1278 = vmatpush1.bf16.xpose.msra.mxu0 0
      %1279 = vmatprep.subr.bf16.mxu0 0
      %1280 = vmatpush1.bf16.xpose.msra.mxu0 0
      %1281 = vmatprep.subr.bf16.mxu0 0
      %1282 = vmatpush1.bf16.xpose.msra.mxu0 0
      %1283 = vmatprep.subr.bf16.mxu0 0
      %1284 = vmatpush1.bf16.xpose.msra.mxu0 0
      %1285 = vmatprep.subr.bf16.mxu0 0
      %1286 = vmatpush1.bf16.xpose.msra.mxu0 0
      %1287 = vmatprep.subr.bf16.mxu0 0
      %1288 = vmatpush1.bf16.xpose.msra.mxu0 0
      %1289 = vmatprep.subr.bf16.mxu0 0
      %1290 = vmatpush1.bf16.xpose.msra.mxu0 0
      %1291 = vmatprep.mubr.bf16.mxu0 0
      %1292 = vmatmul.mubr.bf16.gmra.mrb[0].mxu0 %v1251
      %v1293 = vpop.f32.mrb[0].mxu0
      %v1294 = vadd.f32 0.0, %v1293
      %v1295 = vpop.f32.mrb[0].mxu0
      %v1296 = vpop.f32.mrb[0].mxu0
      %v1297 = vadd.f32 0.0, %v1296
      %v1298 = vpop.f32.mrb[0].mxu0
      %1299 = vdwg.mxu0
      %1301 = vrot.lane.b32.xlu0 %v1236, 64
      %v1302 = vpop.permute.xlu0 %1301
      %v1304 = vsel %vm300, %v1302, 0
      %v1307 = vsel %vm300, %v1241, 0
      %v1310 = vsel %vm300, %v1242, 0
      %1312 = vmatprep.subr.bf16.mxu0 0
      %1313 = vmatpush1.bf16.xpose.msra.mxu0 %v1307
      %1314 = vmatprep.subr.bf16.mxu0 0
      %1315 = vmatpush1.bf16.xpose.msra.mxu0 %v1310
      %1316 = vmatprep.subr.bf16.mxu0 0
      %1317 = vmatpush1.bf16.xpose.msra.mxu0 0
      %1318 = vmatprep.subr.bf16.mxu0 0
      %1319 = vmatpush1.bf16.xpose.msra.mxu0 0
      %1320 = vmatprep.subr.bf16.mxu0 0
      %1321 = vmatpush1.bf16.xpose.msra.mxu0 0
      %1322 = vmatprep.subr.bf16.mxu0 0
      %1323 = vmatpush1.bf16.xpose.msra.mxu0 0
      %1324 = vmatprep.subr.bf16.mxu0 0
      %1325 = vmatpush1.bf16.xpose.msra.mxu0 0
      %1326 = vmatprep.subr.bf16.mxu0 0
      %1327 = vmatpush1.bf16.xpose.msra.mxu0 0
      %1328 = vmatprep.subr.bf16.mxu0 0
      %1329 = vmatpush1.bf16.xpose.msra.mxu0 0
      %1330 = vmatprep.subr.bf16.mxu0 0
      %1331 = vmatpush1.bf16.xpose.msra.mxu0 0
      %1332 = vmatprep.subr.bf16.mxu0 0
      %1333 = vmatpush1.bf16.xpose.msra.mxu0 0
      %1334 = vmatprep.subr.bf16.mxu0 0
      %1335 = vmatpush1.bf16.xpose.msra.mxu0 0
      %1336 = vmatprep.subr.bf16.mxu0 0
      %1337 = vmatpush1.bf16.xpose.msra.mxu0 0
      %1338 = vmatprep.subr.bf16.mxu0 0
      %1339 = vmatpush1.bf16.xpose.msra.mxu0 0
      %1340 = vmatprep.subr.bf16.mxu0 0
      %1341 = vmatpush1.bf16.xpose.msra.mxu0 0
      %1342 = vmatprep.subr.bf16.mxu0 0
      %1343 = vmatpush1.bf16.xpose.msra.mxu0 0
      %1344 = vmatprep.mubr.bf16.mxu0 0
      %1345 = vmatmul.mubr.bf16.gmra.mrb[0].mxu0 %v1304
      %v1346 = vpop.f32.mrb[0].mxu0
      %v1347 = vadd.f32 0.0, %v1346
      %v1348 = vpop.f32.mrb[0].mxu0
      %v1349 = vpop.f32.mrb[0].mxu0
      %v1350 = vadd.f32 0.0, %v1349
      %v1351 = vpop.f32.mrb[0].mxu0
      %1352 = vdwg.mxu0
      %1354 = vrot.lane.b32.xlu0 %v1237, 64
      %v1355 = vpop.permute.xlu0 %1354
      %v1357 = vsel %vm300, %v1355, 0
      %v1360 = vsel %vm300, %v1243, 0
      %v1363 = vsel %vm300, %v1244, 0
      %1365 = vmatprep.subr.bf16.mxu0 0
      %1366 = vmatpush1.bf16.xpose.msra.mxu0 %v1360
      %1367 = vmatprep.subr.bf16.mxu0 0
      %1368 = vmatpush1.bf16.xpose.msra.mxu0 %v1363
      %1369 = vmatprep.subr.bf16.mxu0 0
      %1370 = vmatpush1.bf16.xpose.msra.mxu0 0
      %1371 = vmatprep.subr.bf16.mxu0 0
      %1372 = vmatpush1.bf16.xpose.msra.mxu0 0
      %1373 = vmatprep.subr.bf16.mxu0 0
      %1374 = vmatpush1.bf16.xpose.msra.mxu0 0
      %1375 = vmatprep.subr.bf16.mxu0 0
      %1376 = vmatpush1.bf16.xpose.msra.mxu0 0
      %1377 = vmatprep.subr.bf16.mxu0 0
      %1378 = vmatpush1.bf16.xpose.msra.mxu0 0
      %1379 = vmatprep.subr.bf16.mxu0 0
      %1380 = vmatpush1.bf16.xpose.msra.mxu0 0
      %1381 = vmatprep.subr.bf16.mxu0 0
      %1382 = vmatpush1.bf16.xpose.msra.mxu0 0
      %1383 = vmatprep.subr.bf16.mxu0 0
      %1384 = vmatpush1.bf16.xpose.msra.mxu0 0
      %1385 = vmatprep.subr.bf16.mxu0 0
      %1386 = vmatpush1.bf16.xpose.msra.mxu0 0
      %1387 = vmatprep.subr.bf16.mxu0 0
      %1388 = vmatpush1.bf16.xpose.msra.mxu0 0
      %1389 = vmatprep.subr.bf16.mxu0 0
      %1390 = vmatpush1.bf16.xpose.msra.mxu0 0
      %1391 = vmatprep.subr.bf16.mxu0 0
      %1392 = vmatpush1.bf16.xpose.msra.mxu0 0
      %1393 = vmatprep.subr.bf16.mxu0 0
      %1394 = vmatpush1.bf16.xpose.msra.mxu0 0
      %1395 = vmatprep.subr.bf16.mxu0 0
      %1396 = vmatpush1.bf16.xpose.msra.mxu0 0
      %1397 = vmatprep.mubr.bf16.mxu0 0
      %1398 = vmatmul.mubr.bf16.gmra.mrb[0].mxu0 %v1357
      %v1399 = vpop.f32.mrb[0].mxu0
      %v1400 = vadd.f32 0.0, %v1399
      %v1401 = vpop.f32.mrb[0].mxu0
      %v1402 = vpop.f32.mrb[0].mxu0
      %v1403 = vadd.f32 0.0, %v1402
      %v1404 = vpop.f32.mrb[0].mxu0
      %1405 = vdwg.mxu0
      %1407 = vrot.lane.b32.xlu0 %v1238, 64
      %v1408 = vpop.permute.xlu0 %1407
      %v1410 = vsel %vm300, %v1408, 0
      %v1413 = vsel %vm300, %v1245, 0
      %v1416 = vsel %vm300, %v1246, 0
      %1418 = vmatprep.subr.bf16.mxu0 0
      %1419 = vmatpush1.bf16.xpose.msra.mxu0 %v1413
      %1420 = vmatprep.subr.bf16.mxu0 0
      %1421 = vmatpush1.bf16.xpose.msra.mxu0 %v1416
      %1422 = vmatprep.subr.bf16.mxu0 0
      %1423 = vmatpush1.bf16.xpose.msra.mxu0 0
      %1424 = vmatprep.subr.bf16.mxu0 0
      %1425 = vmatpush1.bf16.xpose.msra.mxu0 0
      %1426 = vmatprep.subr.bf16.mxu0 0
      %1427 = vmatpush1.bf16.xpose.msra.mxu0 0
      %1428 = vmatprep.subr.bf16.mxu0 0
      %1429 = vmatpush1.bf16.xpose.msra.mxu0 0
      %1430 = vmatprep.subr.bf16.mxu0 0
      %1431 = vmatpush1.bf16.xpose.msra.mxu0 0
      %1432 = vmatprep.subr.bf16.mxu0 0
      %1433 = vmatpush1.bf16.xpose.msra.mxu0 0
      %1434 = vmatprep.subr.bf16.mxu0 0
      %1435 = vmatpush1.bf16.xpose.msra.mxu0 0
      %1436 = vmatprep.subr.bf16.mxu0 0
      %1437 = vmatpush1.bf16.xpose.msra.mxu0 0
      %1438 = vmatprep.subr.bf16.mxu0 0
      %1439 = vmatpush1.bf16.xpose.msra.mxu0 0
      %1440 = vmatprep.subr.bf16.mxu0 0
      %1441 = vmatpush1.bf16.xpose.msra.mxu0 0
      %1442 = vmatprep.subr.bf16.mxu0 0
      %1443 = vmatpush1.bf16.xpose.msra.mxu0 0
      %1444 = vmatprep.subr.bf16.mxu0 0
      %1445 = vmatpush1.bf16.xpose.msra.mxu0 0
      %1446 = vmatprep.subr.bf16.mxu0 0
      %1447 = vmatpush1.bf16.xpose.msra.mxu0 0
      %1448 = vmatprep.subr.bf16.mxu0 0
      %1449 = vmatpush1.bf16.xpose.msra.mxu0 0
      %1450 = vmatprep.mubr.bf16.mxu0 0
      %1451 = vmatmul.mubr.bf16.gmra.mrb[0].mxu0 %v1410
      %v1452 = vpop.f32.mrb[0].mxu0
      %v1453 = vadd.f32 0.0, %v1452
      %v1454 = vpop.f32.mrb[0].mxu0
      %v1455 = vpop.f32.mrb[0].mxu0
      %v1456 = vadd.f32 0.0, %v1455
      %v1457 = vpop.f32.mrb[0].mxu0
      %1458 = vdwg.mxu0
      %v1459 = vpack.c.bf16 %v1297, %v1294
      %v1460 = vpack.c.bf16 %v1350, %v1347
      %v1461 = vpack.c.bf16 %v1403, %v1400
      %v1462 = vpack.c.bf16 %v1456, %v1453
      %v1463 = vld [vmem:[%s2] sm:$0xf]
      %v1464 = vld [vmem:[%s2 + $0x4] sm:$0xf]
      %v1465 = vld [vmem:[%s2 + $0x8] sm:$0xf]
      %v1466 = vld [vmem:[%s2 + $0xc] sm:$0xf]
      %v1467 = vld [vmem:[%s3] sm:$0x1]
      %v1469 = vlaneseq
      %v1470 = vshrl.u32 %v1469, 7
      %v1471 = vsub.s32 0, %v1470
      %v1472 = vrot.slane %v1467, %v1471
      %v1478 = vunpack.c.l.b16 %v1463
      %v1479 = vunpack.c.l.b16 %v1464
      %v1480 = vunpack.c.l.b16 %v1465
      %v1481 = vunpack.c.l.b16 %v1466
      %v1482 = vpack.c.b16 %v1479, %v1478
      %v1483 = vpack.c.b16 %v1481, %v1480
      %v1487 = vsel %vm300, %v1459, 0
      %v1490 = vsel %vm300, %v1460, 0
      %v1493 = vsel %vm300, %v1461, 0
      %v1496 = vsel %vm300, %v1462, 0
      %1498 = vmatprep.subr.bf16.mxu0 0
      %1499 = vmatpush1.bf16.msra.mxu0 %v1482
      %1500 = vmatprep.subr.bf16.mxu0 0
      %1501 = vmatpush1.bf16.msra.mxu0 %v1483
      %1502 = vmatprep.subr.bf16.mxu0 0
      %1503 = vmatpush1.bf16.msra.mxu0 0
      %1504 = vmatprep.subr.bf16.mxu0 0
      %1505 = vmatpush1.bf16.msra.mxu0 0
      %1506 = vmatprep.subr.bf16.mxu0 0
      %1507 = vmatpush1.bf16.msra.mxu0 0
      %1508 = vmatprep.subr.bf16.mxu0 0
      %1509 = vmatpush1.bf16.msra.mxu0 0
      %1510 = vmatprep.subr.bf16.mxu0 0
      %1511 = vmatpush1.bf16.msra.mxu0 0
      %1512 = vmatprep.subr.bf16.mxu0 0
      %1513 = vmatpush1.bf16.msra.mxu0 0
      %1514 = vmatprep.subr.bf16.mxu0 0
      %1515 = vmatpush1.bf16.msra.mxu0 0
      %1516 = vmatprep.subr.bf16.mxu0 0
      %1517 = vmatpush1.bf16.msra.mxu0 0
      %1518 = vmatprep.subr.bf16.mxu0 0
      %1519 = vmatpush1.bf16.msra.mxu0 0
      %1520 = vmatprep.subr.bf16.mxu0 0
      %1521 = vmatpush1.bf16.msra.mxu0 0
      %1522 = vmatprep.subr.bf16.mxu0 0
      %1523 = vmatpush1.bf16.msra.mxu0 0
      %1524 = vmatprep.subr.bf16.mxu0 0
      %1525 = vmatpush1.bf16.msra.mxu0 0
      %1526 = vmatprep.subr.bf16.mxu0 0
      %1527 = vmatpush1.bf16.msra.mxu0 0
      %1528 = vmatprep.subr.bf16.mxu0 0
      %1529 = vmatpush1.bf16.msra.mxu0 0
      %1530 = vmatprep.mubr.bf16.mxu0 0
      %1531 = vmatmul.mubr.bf16.gmra.mrb[0].mxu0 %v1487
      %v1532 = vpop.f32.mrb[0].mxu0
      %v1533 = vadd.f32 %v1472, %v1532
      %v1534 = vpop.f32.mrb[0].mxu0
      %v1535 = vpop.f32.mrb[0].mxu0
      %v1536 = vadd.f32 %v1472, %v1535
      %v1537 = vpop.f32.mrb[0].mxu0
      %1538 = vmatprep.mubr.bf16.mxu0 0
      %1539 = vmatmul.mubr.bf16.gmra.mrb[0].mxu0 %v1490
      %v1540 = vpop.f32.mrb[0].mxu0
      %v1541 = vadd.f32 %v1472, %v1540
      %v1542 = vpop.f32.mrb[0].mxu0
      %v1543 = vpop.f32.mrb[0].mxu0
      %v1544 = vadd.f32 %v1472, %v1543
      %v1545 = vpop.f32.mrb[0].mxu0
      %1546 = vmatprep.mubr.bf16.mxu0 0
      %1547 = vmatmul.mubr.bf16.gmra.mrb[0].mxu0 %v1493
      %v1548 = vpop.f32.mrb[0].mxu0
      %v1549 = vadd.f32 %v1472, %v1548
      %v1550 = vpop.f32.mrb[0].mxu0
      %v1551 = vpop.f32.mrb[0].mxu0
      %v1552 = vadd.f32 %v1472, %v1551
      %v1553 = vpop.f32.mrb[0].mxu0
      %1554 = vmatprep.mubr.bf16.mxu0 0
      %1555 = vmatmul.mubr.bf16.gmra.mrb[0].mxu0 %v1496
      %v1556 = vpop.f32.mrb[0].mxu0
      %v1557 = vadd.f32 %v1472, %v1556
      %v1558 = vpop.f32.mrb[0].mxu0
      %v1559 = vpop.f32.mrb[0].mxu0
      %v1560 = vadd.f32 %v1472, %v1559
      %v1561 = vpop.f32.mrb[0].mxu0
      %1562 = vdwg.mxu0
      %1563 = vst.msk [vmem:[%s253] sm:$0xff] %vm300, %v1533
      %1564 = vst.msk [vmem:[%s253 + $0x8] sm:$0xff] %vm300, %v1536
      %1565 = vst.msk [vmem:[%s253 + $0x10] sm:$0xff] %vm300, %v1541
      %1566 = vst.msk [vmem:[%s253 + $0x18] sm:$0xff] %vm300, %v1544
      %1567 = vst.msk [vmem:[%s253 + $0x20] sm:$0xff] %vm300, %v1549
      %1568 = vst.msk [vmem:[%s253 + $0x28] sm:$0xff] %vm300, %v1552
      %1569 = vst.msk [vmem:[%s253 + $0x30] sm:$0xff] %vm300, %v1557
      %1570 = vst.msk [vmem:[%s253 + $0x38] sm:$0xff] %vm300, %v1560
      %s1571 = smul.u32 8, %s17
      %p1572 = scmp.lt.s32.totalorder %s1571, 15
      %s1573 = scalar_select %p1572, %s1571, 15
      %s1574 = smul.addr %s1573, 8
      %s1575 = scalar_lea.vmem %s6, %s1574
      // Predicated region
      $region45: #{tpu_custom_call.1} parent=43 // pred_check
        %p1576 = pneg %p166
      $region46: #{tpu_custom_call.1} parent=43 // pred_check_branch
        %1578 = sbr.rel (%p1576) target = $region48
      $region47: #{tpu_custom_call.1} parent=43 // pred_region
        %s1579 = smul.u32 8, %s17
      $region48: #{tpu_custom_call.1} parent=43 // pred_fallthru
        _
    $region44: #{tpu_custom_call.1} parent=5 // pred_fallthru
      _
    %p1580 = scmp.le.s32.totalorder 2, %s12
    // Predicated region
    $region49: #{tpu_custom_call.1} parent=5 // pred_check
      %p1581 = pneg %p1580
    $region50: #{tpu_custom_call.1} parent=5 // pred_check_branch
      %1583 = sbr.rel (%p1581) target = $region52
    $region51: #{tpu_custom_call.1} parent=5 // pred_region
      %s1584 = ssub.s32 %s12, 2
      // Predicated region
      $region53: #{tpu_custom_call.1} parent=51 // pred_check
        %p1585 = pneg %p172
      $region54: #{tpu_custom_call.1} parent=51 // pred_check_branch
        %1587 = sbr.rel (%p1585) target = $region56
      $region55: #{tpu_custom_call.1} parent=51 // pred_region
        %s1588 = smul.u32 8, %s18
        %p1589 = scmp.lt.s32.totalorder %s1588, 15
        %s1590 = scalar_select %p1589, %s1588, 15
        %s1591 = smul.addr %s1590, 8
        %s1592 = scalar_lea.vmem %s6, %s1591
      $region56: #{tpu_custom_call.1} parent=51 // pred_fallthru
        _
    $region52: #{tpu_custom_call.1} parent=5 // pred_fallthru
      _
  $region6: #{tpu_custom_call.1} parent=0 // loop_footer
    %s16 = sadd.s32 1, %s12
  $region7: #{tpu_custom_call.1} parent=0 // loop_footer_branch
    %11 = sbr.rel target = $region3
  $region8: #{tpu_custom_call.1} parent=0 // loop_exit
    _

</llo_original>
